<compile_context>
chip_gen: v7x
topology: tpu7x:2x2x1
jax: 0.10.0
libtpu: 0.0.40
codegen_flags: <defaults>
</compile_context>

<pallas_src>
import functools
import math

import jax
import jax.numpy as jnp
from jax import lax
from jax.experimental import pallas as pl
from jax.experimental.pallas import tpu as pltpu


# ---------------------------------------------------------------------------
# Fused attention kernel (one grid step = one batch tile of Bt elements)
# ---------------------------------------------------------------------------
def _fused_attention_kernel(x_ref, wq_ref, wk_ref, wv_ref, wo_ref, b_ref,
                            o_ref, *, heads, dim_head):
    """x_ref:  (Bt, N, dim)
       wq/wk/wv_ref: (H, dim, d)  bf16, scale folded into wq
       wo_ref: (H, d, dim)        bf16
       b_ref:  (1, dim)           f32
       o_ref:  (Bt, N, dim)
    """
    Bt, N, dim = x_ref.shape

    # Flatten batch tile for the projections (merges leading dims only).
    xf = x_ref[...].reshape(Bt * N, dim).astype(jnp.bfloat16)     # (Bt*N, dim)

    acc = jnp.zeros((Bt * N, dim), jnp.float32)

    # heads is small and static -> unrolled Python loop; every weight slab is a
    # whole (dim, d) / (d, dim) block, so no misaligned lane slices.
    for h in range(heads):
        wq_h = wq_ref[h]                                          # (dim, d)
        wk_h = wk_ref[h]
        wv_h = wv_ref[h]
        wo_h = wo_ref[h]                                          # (d, dim)

        # Per-head projections (scale already folded into wq_h).
        q = jnp.dot(xf, wq_h, preferred_element_type=jnp.float32)
        k = jnp.dot(xf, wk_h, preferred_element_type=jnp.float32)
        v = jnp.dot(xf, wv_h, preferred_element_type=jnp.float32)

        q3 = q.astype(jnp.bfloat16).reshape(Bt, N, dim_head)
        k3 = k.astype(jnp.bfloat16).reshape(Bt, N, dim_head)
        v3 = v.astype(jnp.bfloat16).reshape(Bt, N, dim_head)

        # scores: (Bt, N, d) x (Bt, N, d) -> (Bt, N, N), batched over Bt,
        # contracting the shared last axis (no explicit transpose of k).
        s = lax.dot_general(
            q3, k3,
            dimension_numbers=(((2,), (2,)), ((0,), (0,))),
            preferred_element_type=jnp.float32,
        )

        # Numerically stable softmax; reciprocal goes to the (idle) EUP.
        s = s - jnp.max(s, axis=-1, keepdims=True)
        p = jnp.exp(s)
        p = p * pl.reciprocal(jnp.sum(p, axis=-1, keepdims=True), approx=True)

        # attention output: (Bt, N, N) x (Bt, N, d) -> (Bt, N, d)
        o3 = lax.dot_general(
            p.astype(jnp.bfloat16), v3,
            dimension_numbers=(((2,), (1,)), ((0,), (0,))),
            preferred_element_type=jnp.float32,
        )

        # Head merge fused into the output projection: accumulate this head's
        # contribution o_h @ w_out[h*d:(h+1)*d, :]  (no 'b h n d -> b n (h d)').
        acc = acc + jnp.dot(
            o3.reshape(Bt * N, dim_head).astype(jnp.bfloat16), wo_h,
            preferred_element_type=jnp.float32)

    y = acc + b_ref[...]                                          # (+ bias)
    o_ref[...] = y.reshape(Bt, N, dim).astype(o_ref.dtype)


# ---------------------------------------------------------------------------
# Parameter preparation (one-time, outside the per-call path)
# ---------------------------------------------------------------------------
def prepare_params(raw, heads, dim_head):
    """Split PyTorch-style params into per-head, MXU-friendly bf16 slabs.

    raw: {"w_qkv": (dim, 3*inner), "w_out": (inner, dim), "b_out": (dim,)}
    """
    dim = raw["w_qkv"].shape[0]
    inner = heads * dim_head
    scale = dim_head ** (-0.5)

    w_qkv = raw["w_qkv"]
    w_q = w_qkv[:, :inner] * scale          # fold softmax scale into w_q once
    w_k = w_qkv[:, inner:2 * inner]
    w_v = w_qkv[:, 2 * inner:]

    def per_head_cols(w):                    # (dim, H*d) -> (H, dim, d)
        return w.reshape(dim, heads, dim_head).transpose(1, 0, 2)

    return {
        "wq": per_head_cols(w_q).astype(jnp.bfloat16),
        "wk": per_head_cols(w_k).astype(jnp.bfloat16),
        "wv": per_head_cols(w_v).astype(jnp.bfloat16),
        "wo": raw["w_out"].reshape(heads, dim_head, dim).astype(jnp.bfloat16),
        "b_out": raw["b_out"].reshape(1, dim).astype(jnp.float32),
    }


def _vmem_cap_bytes():
    """Generation-aware scoped-VMEM cap (conservative default)."""
    kind = ""
    try:
        kind = jax.devices()[0].device_kind.lower()
    except Exception:
        pass
    if ("v5" in kind) or ("v6" in kind):
        return 100 << 20            # 128 MiB physical VMEM on v5e/v6e
    return 48 << 20                 # v7x (64 MiB physical) / unknown


def _pick_batch_tile(B, N, dim, heads, dim_head):
    """Amortize per-step overhead while keeping >= 2 grid steps (v7x: 2 TCs)."""
    if B <= 1:
        return 1
    per_elem = 4 * (2 * N * dim + 4 * N * dim_head + 2 * N * N + N * dim)
    budget = 8 << 20
    bt = max(1, B // 2)
    while bt > 1 and (B % bt != 0 or bt * per_elem > budget):
        bt -= 1
    return bt


# ---------------------------------------------------------------------------
# Wrapper
# ---------------------------------------------------------------------------
def attention_forward(x, prepared, heads, dim_head, batch_tile=None):
    """x: [B, N, dim] -> [B, N, dim] (self-attention, eval mode)."""
    B, N, dim = x.shape
    inner = heads * dim_head

    Bt = batch_tile or _pick_batch_tile(B, N, dim, heads, dim_head)
    assert B % Bt == 0, "batch tile must divide batch"
    grid = (B // Bt,)

    # ---- advisory cost estimate -------------------------------------------
    flops = (
        2 * B * N * dim * 3 * inner             # qkv projections
        + 2 * B * heads * N * N * dim_head * 2  # qk^T and attn @ v
        + 2 * B * N * inner * dim               # output projection
    )
    transcendentals = B * heads * N * N
    bytes_accessed = (
        4 * x.size + 4 * B * N * dim
        + 2 * (prepared["wq"].size + prepared["wk"].size
               + prepared["wv"].size + prepared["wo"].size)
        + 4 * prepared["b_out"].size)

    # ---- scoped-VMEM budget: per-step working set (generous fudge for
    #      relayout temporaries), capped per generation. ----------------------
    weight_bytes = 2 * (3 * heads * dim * dim_head + heads * dim_head * dim)
    per_step = (
        2 * 2 * 4 * Bt * N * dim                      # x/out blocks, 2x buffered
        + 2 * weight_bytes + 4 * dim                  # resident weights + bias
        + 4 * Bt * N * (dim + 4 * dim_head + 2 * N)   # kernel intermediates
        + 4 * Bt * N * dim)                           # f32 accumulator
    vmem_limit = int(min(_vmem_cap_bytes(), max(32 << 20, 3 * per_step)))

    kernel = functools.partial(
        _fused_attention_kernel, heads=heads, dim_head=dim_head)

    # TODO(synk): lane-dense flattened output (B, N*dim) helps when dim < 128;
    #             skipped here to keep block second-minor dims (8,128)-legal.
    return pl.pallas_call(
        kernel,
        out_shape=jax.ShapeDtypeStruct((B, N, dim), x.dtype),
        grid=grid,
        in_specs=[
            pl.BlockSpec((Bt, N, dim), lambda b: (b, 0, 0)),              # x
            pl.BlockSpec((heads, dim, dim_head), lambda b: (0, 0, 0)),    # wq
            pl.BlockSpec((heads, dim, dim_head), lambda b: (0, 0, 0)),    # wk
            pl.BlockSpec((heads, dim, dim_head), lambda b: (0, 0, 0)),    # wv
            pl.BlockSpec((heads, dim_head, dim), lambda b: (0, 0, 0)),    # wo
            pl.BlockSpec((1, dim), lambda b: (0, 0)),                     # bias
        ],
        out_specs=pl.BlockSpec((Bt, N, dim), lambda b: (b, 0, 0)),
        compiler_params=pltpu.CompilerParams(
            dimension_semantics=("parallel",),
            vmem_limit_bytes=vmem_limit,
        ),
        cost_estimate=pl.CostEstimate(
            flops=int(flops),
            transcendentals=int(transcendentals),
            bytes_accessed=int(bytes_accessed),
        ),
    )(x, prepared["wq"], prepared["wk"], prepared["wv"], prepared["wo"],
      prepared["b_out"])


# ---------------------------------------------------------------------------
# Pure-JAX reference (f32) for correctness check
# ---------------------------------------------------------------------------
def attention_reference(x, raw, heads, dim_head):
    B, N, dim = x.shape
    inner = heads * dim_head
    scale = dim_head ** (-0.5)
    qkv = x @ raw["w_qkv"]                                    # (B, N, 3*inner)
    q, k, v = jnp.split(qkv, 3, axis=-1)

    def to_heads(t):
        return t.reshape(B, N, heads, dim_head).transpose(0, 2, 1, 3)

    q, k, v = map(to_heads, (q, k, v))                        # (B, H, N, d)
    dots = jnp.einsum("bhnd,bhmd->bhnm", q, k) * scale
    attn = jax.nn.softmax(dots, axis=-1)
    out = jnp.einsum("bhnm,bhmd->bhnd", attn, v)
    out = out.transpose(0, 2, 1, 3).reshape(B, N, inner)
    return out @ raw["w_out"] + raw["b_out"]


def init_params(key, dim, heads, dim_head):
    """Deterministic parameter init mimicking nn.Linear default (uniform)."""
    inner_dim = heads * dim_head
    k1, k2, k3 = jax.random.split(key, 3)
    bound_qkv = 1.0 / math.sqrt(dim)
    bound_out = 1.0 / math.sqrt(inner_dim)
    return {
        # nn.Linear(dim, 3*inner, bias=False).weight is [3*inner, dim];
        # stored transposed [dim, 3*inner] for x @ W.
        "w_qkv": jax.random.uniform(
            k1, (dim, 3 * inner_dim), jnp.float32, -bound_qkv, bound_qkv),
        "w_out": jax.random.uniform(
            k2, (inner_dim, dim), jnp.float32, -bound_out, bound_out),
        "b_out": jax.random.uniform(
            k3, (dim,), jnp.float32, -bound_out, bound_out),
    }


if __name__ == "__main__":
    # Small shapes consistent with the module: dim=32, heads=4, dim_head=16
    B, N, dim = 2, 8, 32
    heads, dim_head = 4, 16

    key = jax.random.PRNGKey(0)
    kx, kp = jax.random.split(key)
    x = jax.random.normal(kx, (B, N, dim), jnp.float32)
    raw = init_params(kp, dim, heads, dim_head)

    prepared = prepare_params(raw, heads, dim_head)   # one-time param prep

    y = attention_forward(x, prepared, heads, dim_head)
    jax.block_until_ready(y)
    assert y.shape == (B, N, dim)

    # Correctness vs f32 pure-JAX reference (loose tolerance: bf16 MXU operands
    # + approx EUP reciprocal in the softmax denominator).
    y_ref = attention_reference(x, raw, heads, dim_head)
    assert jnp.allclose(y, y_ref, rtol=5e-2, atol=5e-2), (
        "mismatch vs reference; max abs diff = %f"
        % float(jnp.max(jnp.abs(y - y_ref))))

    print("KERNEL_OK")
</pallas_src>

<mosaic_0001>
module attributes {stable_mosaic.version = 11 : i64} {
  func.func @_fused_attention_kernel(%arg0: i32, %arg1: memref<1x8x32xf32, #tpu.memory_space<vmem>>, %arg2: memref<4x32x16xbf16, #tpu.memory_space<vmem>>, %arg3: memref<4x32x16xbf16, #tpu.memory_space<vmem>>, %arg4: memref<4x32x16xbf16, #tpu.memory_space<vmem>>, %arg5: memref<4x16x32xbf16, #tpu.memory_space<vmem>>, %arg6: memref<1x32xf32, #tpu.memory_space<vmem>>, %arg7: memref<1x8x32xf32, #tpu.memory_space<vmem>>) attributes {dimension_semantics = [#tpu.dimension_semantics<parallel>], iteration_bounds = array<i64: 2>, scalar_prefetch = 0 : i64, scratch_operands = 0 : i64, tpu.core_type = #tpu.core_type<tc>, window_params = [{transform_indices = @transform_0, window_bounds = array<i64: 1, 8, 32>}, {pipeline_mode = #tpu.pipeline_mode<synchronous>, transform_indices = @transform_1, window_bounds = array<i64: 4, 32, 16>}, {pipeline_mode = #tpu.pipeline_mode<synchronous>, transform_indices = @transform_2, window_bounds = array<i64: 4, 32, 16>}, {pipeline_mode = #tpu.pipeline_mode<synchronous>, transform_indices = @transform_3, window_bounds = array<i64: 4, 32, 16>}, {pipeline_mode = #tpu.pipeline_mode<synchronous>, transform_indices = @transform_4, window_bounds = array<i64: 4, 16, 32>}, {pipeline_mode = #tpu.pipeline_mode<synchronous>, transform_indices = @transform_5, window_bounds = array<i64: 1, 32>}, {transform_indices = @transform_6, window_bounds = array<i64: 1, 8, 32>}]} {
    %c0 = arith.constant 0 : index
    %c0_0 = arith.constant 0 : index
    %c0_1 = arith.constant 0 : index
    %0 = vector.load %arg1[%c0, %c0_0, %c0_1] : memref<1x8x32xf32, #tpu.memory_space<vmem>>, vector<1x8x32xf32>
    %1 = vector.shape_cast %0 : vector<1x8x32xf32> to vector<8x32xf32>
    %2 = arith.truncf %1 : vector<8x32xf32> to vector<8x32xbf16>
    %cst = arith.constant 0.000000e+00 : f32
    %3 = vector.broadcast %cst : f32 to vector<8x32xf32>
    %c0_2 = arith.constant 0 : index
    %c0_3 = arith.constant 0 : index
    %c0_4 = arith.constant 0 : index
    %4 = vector.load %arg2[%c0_2, %c0_3, %c0_4] : memref<4x32x16xbf16, #tpu.memory_space<vmem>>, vector<1x32x16xbf16>
    %5 = vector.shape_cast %4 : vector<1x32x16xbf16> to vector<32x16xbf16>
    %c0_5 = arith.constant 0 : index
    %c0_6 = arith.constant 0 : index
    %c0_7 = arith.constant 0 : index
    %6 = vector.load %arg3[%c0_5, %c0_6, %c0_7] : memref<4x32x16xbf16, #tpu.memory_space<vmem>>, vector<1x32x16xbf16>
    %7 = vector.shape_cast %6 : vector<1x32x16xbf16> to vector<32x16xbf16>
    %c0_8 = arith.constant 0 : index
    %c0_9 = arith.constant 0 : index
    %c0_10 = arith.constant 0 : index
    %8 = vector.load %arg4[%c0_8, %c0_9, %c0_10] : memref<4x32x16xbf16, #tpu.memory_space<vmem>>, vector<1x32x16xbf16>
    %9 = vector.shape_cast %8 : vector<1x32x16xbf16> to vector<32x16xbf16>
    %c0_11 = arith.constant 0 : index
    %c0_12 = arith.constant 0 : index
    %c0_13 = arith.constant 0 : index
    %10 = vector.load %arg5[%c0_11, %c0_12, %c0_13] : memref<4x16x32xbf16, #tpu.memory_space<vmem>>, vector<1x16x32xbf16>
    %11 = vector.shape_cast %10 : vector<1x16x32xbf16> to vector<16x32xbf16>
    %cst_14 = arith.constant dense<0.000000e+00> : vector<8x16xf32>
    %12 = tpu.matmul %2, %5, %cst_14 {dimension_numbers = #tpu.dot_dimension_numbers<[1], [0], [0], [1], [0, 0, 1, 1], [], []>} : vector<8x32xbf16>, vector<32x16xbf16>, vector<8x16xf32> -> vector<8x16xf32>
    %cst_15 = arith.constant dense<0.000000e+00> : vector<8x16xf32>
    %13 = tpu.matmul %2, %7, %cst_15 {dimension_numbers = #tpu.dot_dimension_numbers<[1], [0], [0], [1], [0, 0, 1, 1], [], []>} : vector<8x32xbf16>, vector<32x16xbf16>, vector<8x16xf32> -> vector<8x16xf32>
    %cst_16 = arith.constant dense<0.000000e+00> : vector<8x16xf32>
    %14 = tpu.matmul %2, %9, %cst_16 {dimension_numbers = #tpu.dot_dimension_numbers<[1], [0], [0], [1], [0, 0, 1, 1], [], []>} : vector<8x32xbf16>, vector<32x16xbf16>, vector<8x16xf32> -> vector<8x16xf32>
    %15 = arith.truncf %12 : vector<8x16xf32> to vector<8x16xbf16>
    %16 = vector.shape_cast %15 : vector<8x16xbf16> to vector<1x8x16xbf16>
    %17 = arith.truncf %13 : vector<8x16xf32> to vector<8x16xbf16>
    %18 = vector.shape_cast %17 : vector<8x16xbf16> to vector<1x8x16xbf16>
    %19 = arith.truncf %14 : vector<8x16xf32> to vector<8x16xbf16>
    %20 = vector.shape_cast %19 : vector<8x16xbf16> to vector<1x8x16xbf16>
    %cst_17 = arith.constant dense<0.000000e+00> : vector<1x8x8xf32>
    %21 = tpu.matmul %16, %18, %cst_17 {dimension_numbers = #tpu.dot_dimension_numbers<[2], [2], [1], [1], [0, 0, 0, 1, 1, 1], [0], [0]>} : vector<1x8x16xbf16>, vector<1x8x16xbf16>, vector<1x8x8xf32> -> vector<1x8x8xf32>
    %cst_18 = arith.constant dense<0xFF800000> : vector<1x8xf32>
    %22 = vector.multi_reduction <maximumf>, %21, %cst_18 [2] : vector<1x8x8xf32> to vector<1x8xf32>
    %23 = vector.shape_cast %22 : vector<1x8xf32> to vector<1x8x1xf32>
    %24 = vector.broadcast %23 : vector<1x8x1xf32> to vector<1x8x8xf32>
    %25 = arith.subf %21, %24 : vector<1x8x8xf32>
    %26 = math.exp %25 : vector<1x8x8xf32>
    %cst_19 = arith.constant dense<0.000000e+00> : vector<1x8xf32>
    %27 = vector.multi_reduction <add>, %26, %cst_19 [2] : vector<1x8x8xf32> to vector<1x8xf32>
    %28 = vector.shape_cast %27 : vector<1x8xf32> to vector<1x8x1xf32>
    %29 = tpu.reciprocal %28 {approx = true} : vector<1x8x1xf32> -> vector<1x8x1xf32>
    %30 = vector.broadcast %29 : vector<1x8x1xf32> to vector<1x8x8xf32>
    %31 = arith.mulf %26, %30 : vector<1x8x8xf32>
    %32 = arith.truncf %31 : vector<1x8x8xf32> to vector<1x8x8xbf16>
    %cst_20 = arith.constant dense<0.000000e+00> : vector<1x8x16xf32>
    %33 = tpu.matmul %32, %20, %cst_20 {dimension_numbers = #tpu.dot_dimension_numbers<[2], [1], [1], [2], [0, 0, 0, 1, 1, 2], [0], [0]>} : vector<1x8x8xbf16>, vector<1x8x16xbf16>, vector<1x8x16xf32> -> vector<1x8x16xf32>
    %34 = vector.shape_cast %33 : vector<1x8x16xf32> to vector<8x16xf32>
    %35 = arith.truncf %34 : vector<8x16xf32> to vector<8x16xbf16>
    %cst_21 = arith.constant dense<0.000000e+00> : vector<8x32xf32>
    %36 = tpu.matmul %35, %11, %cst_21 {dimension_numbers = #tpu.dot_dimension_numbers<[1], [0], [0], [1], [0, 0, 1, 1], [], []>} : vector<8x16xbf16>, vector<16x32xbf16>, vector<8x32xf32> -> vector<8x32xf32>
    %37 = arith.addf %3, %36 : vector<8x32xf32>
    %c1 = arith.constant 1 : index
    %c0_22 = arith.constant 0 : index
    %c0_23 = arith.constant 0 : index
    %38 = vector.load %arg2[%c1, %c0_22, %c0_23] : memref<4x32x16xbf16, #tpu.memory_space<vmem>>, vector<1x32x16xbf16>
    %39 = vector.shape_cast %38 : vector<1x32x16xbf16> to vector<32x16xbf16>
    %c1_24 = arith.constant 1 : index
    %c0_25 = arith.constant 0 : index
    %c0_26 = arith.constant 0 : index
    %40 = vector.load %arg3[%c1_24, %c0_25, %c0_26] : memref<4x32x16xbf16, #tpu.memory_space<vmem>>, vector<1x32x16xbf16>
    %41 = vector.shape_cast %40 : vector<1x32x16xbf16> to vector<32x16xbf16>
    %c1_27 = arith.constant 1 : index
    %c0_28 = arith.constant 0 : index
    %c0_29 = arith.constant 0 : index
    %42 = vector.load %arg4[%c1_27, %c0_28, %c0_29] : memref<4x32x16xbf16, #tpu.memory_space<vmem>>, vector<1x32x16xbf16>
    %43 = vector.shape_cast %42 : vector<1x32x16xbf16> to vector<32x16xbf16>
    %c1_30 = arith.constant 1 : index
    %c0_31 = arith.constant 0 : index
    %c0_32 = arith.constant 0 : index
    %44 = vector.load %arg5[%c1_30, %c0_31, %c0_32] : memref<4x16x32xbf16, #tpu.memory_space<vmem>>, vector<1x16x32xbf16>
    %45 = vector.shape_cast %44 : vector<1x16x32xbf16> to vector<16x32xbf16>
    %cst_33 = arith.constant dense<0.000000e+00> : vector<8x16xf32>
    %46 = tpu.matmul %2, %39, %cst_33 {dimension_numbers = #tpu.dot_dimension_numbers<[1], [0], [0], [1], [0, 0, 1, 1], [], []>} : vector<8x32xbf16>, vector<32x16xbf16>, vector<8x16xf32> -> vector<8x16xf32>
    %cst_34 = arith.constant dense<0.000000e+00> : vector<8x16xf32>
    %47 = tpu.matmul %2, %41, %cst_34 {dimension_numbers = #tpu.dot_dimension_numbers<[1], [0], [0], [1], [0, 0, 1, 1], [], []>} : vector<8x32xbf16>, vector<32x16xbf16>, vector<8x16xf32> -> vector<8x16xf32>
    %cst_35 = arith.constant dense<0.000000e+00> : vector<8x16xf32>
    %48 = tpu.matmul %2, %43, %cst_35 {dimension_numbers = #tpu.dot_dimension_numbers<[1], [0], [0], [1], [0, 0, 1, 1], [], []>} : vector<8x32xbf16>, vector<32x16xbf16>, vector<8x16xf32> -> vector<8x16xf32>
    %49 = arith.truncf %46 : vector<8x16xf32> to vector<8x16xbf16>
    %50 = vector.shape_cast %49 : vector<8x16xbf16> to vector<1x8x16xbf16>
    %51 = arith.truncf %47 : vector<8x16xf32> to vector<8x16xbf16>
    %52 = vector.shape_cast %51 : vector<8x16xbf16> to vector<1x8x16xbf16>
    %53 = arith.truncf %48 : vector<8x16xf32> to vector<8x16xbf16>
    %54 = vector.shape_cast %53 : vector<8x16xbf16> to vector<1x8x16xbf16>
    %cst_36 = arith.constant dense<0.000000e+00> : vector<1x8x8xf32>
    %55 = tpu.matmul %50, %52, %cst_36 {dimension_numbers = #tpu.dot_dimension_numbers<[2], [2], [1], [1], [0, 0, 0, 1, 1, 1], [0], [0]>} : vector<1x8x16xbf16>, vector<1x8x16xbf16>, vector<1x8x8xf32> -> vector<1x8x8xf32>
    %cst_37 = arith.constant dense<0xFF800000> : vector<1x8xf32>
    %56 = vector.multi_reduction <maximumf>, %55, %cst_37 [2] : vector<1x8x8xf32> to vector<1x8xf32>
    %57 = vector.shape_cast %56 : vector<1x8xf32> to vector<1x8x1xf32>
    %58 = vector.broadcast %57 : vector<1x8x1xf32> to vector<1x8x8xf32>
    %59 = arith.subf %55, %58 : vector<1x8x8xf32>
    %60 = math.exp %59 : vector<1x8x8xf32>
    %cst_38 = arith.constant dense<0.000000e+00> : vector<1x8xf32>
    %61 = vector.multi_reduction <add>, %60, %cst_38 [2] : vector<1x8x8xf32> to vector<1x8xf32>
    %62 = vector.shape_cast %61 : vector<1x8xf32> to vector<1x8x1xf32>
    %63 = tpu.reciprocal %62 {approx = true} : vector<1x8x1xf32> -> vector<1x8x1xf32>
    %64 = vector.broadcast %63 : vector<1x8x1xf32> to vector<1x8x8xf32>
    %65 = arith.mulf %60, %64 : vector<1x8x8xf32>
    %66 = arith.truncf %65 : vector<1x8x8xf32> to vector<1x8x8xbf16>
    %cst_39 = arith.constant dense<0.000000e+00> : vector<1x8x16xf32>
    %67 = tpu.matmul %66, %54, %cst_39 {dimension_numbers = #tpu.dot_dimension_numbers<[2], [1], [1], [2], [0, 0, 0, 1, 1, 2], [0], [0]>} : vector<1x8x8xbf16>, vector<1x8x16xbf16>, vector<1x8x16xf32> -> vector<1x8x16xf32>
    %68 = vector.shape_cast %67 : vector<1x8x16xf32> to vector<8x16xf32>
    %69 = arith.truncf %68 : vector<8x16xf32> to vector<8x16xbf16>
    %cst_40 = arith.constant dense<0.000000e+00> : vector<8x32xf32>
    %70 = tpu.matmul %69, %45, %cst_40 {dimension_numbers = #tpu.dot_dimension_numbers<[1], [0], [0], [1], [0, 0, 1, 1], [], []>} : vector<8x16xbf16>, vector<16x32xbf16>, vector<8x32xf32> -> vector<8x32xf32>
    %71 = arith.addf %37, %70 : vector<8x32xf32>
    %c2 = arith.constant 2 : index
    %c0_41 = arith.constant 0 : index
    %c0_42 = arith.constant 0 : index
    %72 = vector.load %arg2[%c2, %c0_41, %c0_42] : memref<4x32x16xbf16, #tpu.memory_space<vmem>>, vector<1x32x16xbf16>
    %73 = vector.shape_cast %72 : vector<1x32x16xbf16> to vector<32x16xbf16>
    %c2_43 = arith.constant 2 : index
    %c0_44 = arith.constant 0 : index
    %c0_45 = arith.constant 0 : index
    %74 = vector.load %arg3[%c2_43, %c0_44, %c0_45] : memref<4x32x16xbf16, #tpu.memory_space<vmem>>, vector<1x32x16xbf16>
    %75 = vector.shape_cast %74 : vector<1x32x16xbf16> to vector<32x16xbf16>
    %c2_46 = arith.constant 2 : index
    %c0_47 = arith.constant 0 : index
    %c0_48 = arith.constant 0 : index
    %76 = vector.load %arg4[%c2_46, %c0_47, %c0_48] : memref<4x32x16xbf16, #tpu.memory_space<vmem>>, vector<1x32x16xbf16>
    %77 = vector.shape_cast %76 : vector<1x32x16xbf16> to vector<32x16xbf16>
    %c2_49 = arith.constant 2 : index
    %c0_50 = arith.constant 0 : index
    %c0_51 = arith.constant 0 : index
    %78 = vector.load %arg5[%c2_49, %c0_50, %c0_51] : memref<4x16x32xbf16, #tpu.memory_space<vmem>>, vector<1x16x32xbf16>
    %79 = vector.shape_cast %78 : vector<1x16x32xbf16> to vector<16x32xbf16>
    %cst_52 = arith.constant dense<0.000000e+00> : vector<8x16xf32>
    %80 = tpu.matmul %2, %73, %cst_52 {dimension_numbers = #tpu.dot_dimension_numbers<[1], [0], [0], [1], [0, 0, 1, 1], [], []>} : vector<8x32xbf16>, vector<32x16xbf16>, vector<8x16xf32> -> vector<8x16xf32>
    %cst_53 = arith.constant dense<0.000000e+00> : vector<8x16xf32>
    %81 = tpu.matmul %2, %75, %cst_53 {dimension_numbers = #tpu.dot_dimension_numbers<[1], [0], [0], [1], [0, 0, 1, 1], [], []>} : vector<8x32xbf16>, vector<32x16xbf16>, vector<8x16xf32> -> vector<8x16xf32>
    %cst_54 = arith.constant dense<0.000000e+00> : vector<8x16xf32>
    %82 = tpu.matmul %2, %77, %cst_54 {dimension_numbers = #tpu.dot_dimension_numbers<[1], [0], [0], [1], [0, 0, 1, 1], [], []>} : vector<8x32xbf16>, vector<32x16xbf16>, vector<8x16xf32> -> vector<8x16xf32>
    %83 = arith.truncf %80 : vector<8x16xf32> to vector<8x16xbf16>
    %84 = vector.shape_cast %83 : vector<8x16xbf16> to vector<1x8x16xbf16>
    %85 = arith.truncf %81 : vector<8x16xf32> to vector<8x16xbf16>
    %86 = vector.shape_cast %85 : vector<8x16xbf16> to vector<1x8x16xbf16>
    %87 = arith.truncf %82 : vector<8x16xf32> to vector<8x16xbf16>
    %88 = vector.shape_cast %87 : vector<8x16xbf16> to vector<1x8x16xbf16>
    %cst_55 = arith.constant dense<0.000000e+00> : vector<1x8x8xf32>
    %89 = tpu.matmul %84, %86, %cst_55 {dimension_numbers = #tpu.dot_dimension_numbers<[2], [2], [1], [1], [0, 0, 0, 1, 1, 1], [0], [0]>} : vector<1x8x16xbf16>, vector<1x8x16xbf16>, vector<1x8x8xf32> -> vector<1x8x8xf32>
    %cst_56 = arith.constant dense<0xFF800000> : vector<1x8xf32>
    %90 = vector.multi_reduction <maximumf>, %89, %cst_56 [2] : vector<1x8x8xf32> to vector<1x8xf32>
    %91 = vector.shape_cast %90 : vector<1x8xf32> to vector<1x8x1xf32>
    %92 = vector.broadcast %91 : vector<1x8x1xf32> to vector<1x8x8xf32>
    %93 = arith.subf %89, %92 : vector<1x8x8xf32>
    %94 = math.exp %93 : vector<1x8x8xf32>
    %cst_57 = arith.constant dense<0.000000e+00> : vector<1x8xf32>
    %95 = vector.multi_reduction <add>, %94, %cst_57 [2] : vector<1x8x8xf32> to vector<1x8xf32>
    %96 = vector.shape_cast %95 : vector<1x8xf32> to vector<1x8x1xf32>
    %97 = tpu.reciprocal %96 {approx = true} : vector<1x8x1xf32> -> vector<1x8x1xf32>
    %98 = vector.broadcast %97 : vector<1x8x1xf32> to vector<1x8x8xf32>
    %99 = arith.mulf %94, %98 : vector<1x8x8xf32>
    %100 = arith.truncf %99 : vector<1x8x8xf32> to vector<1x8x8xbf16>
    %cst_58 = arith.constant dense<0.000000e+00> : vector<1x8x16xf32>
    %101 = tpu.matmul %100, %88, %cst_58 {dimension_numbers = #tpu.dot_dimension_numbers<[2], [1], [1], [2], [0, 0, 0, 1, 1, 2], [0], [0]>} : vector<1x8x8xbf16>, vector<1x8x16xbf16>, vector<1x8x16xf32> -> vector<1x8x16xf32>
    %102 = vector.shape_cast %101 : vector<1x8x16xf32> to vector<8x16xf32>
    %103 = arith.truncf %102 : vector<8x16xf32> to vector<8x16xbf16>
    %cst_59 = arith.constant dense<0.000000e+00> : vector<8x32xf32>
    %104 = tpu.matmul %103, %79, %cst_59 {dimension_numbers = #tpu.dot_dimension_numbers<[1], [0], [0], [1], [0, 0, 1, 1], [], []>} : vector<8x16xbf16>, vector<16x32xbf16>, vector<8x32xf32> -> vector<8x32xf32>
    %105 = arith.addf %71, %104 : vector<8x32xf32>
    %c3 = arith.constant 3 : index
    %c0_60 = arith.constant 0 : index
    %c0_61 = arith.constant 0 : index
    %106 = vector.load %arg2[%c3, %c0_60, %c0_61] : memref<4x32x16xbf16, #tpu.memory_space<vmem>>, vector<1x32x16xbf16>
    %107 = vector.shape_cast %106 : vector<1x32x16xbf16> to vector<32x16xbf16>
    %c3_62 = arith.constant 3 : index
    %c0_63 = arith.constant 0 : index
    %c0_64 = arith.constant 0 : index
    %108 = vector.load %arg3[%c3_62, %c0_63, %c0_64] : memref<4x32x16xbf16, #tpu.memory_space<vmem>>, vector<1x32x16xbf16>
    %109 = vector.shape_cast %108 : vector<1x32x16xbf16> to vector<32x16xbf16>
    %c3_65 = arith.constant 3 : index
    %c0_66 = arith.constant 0 : index
    %c0_67 = arith.constant 0 : index
    %110 = vector.load %arg4[%c3_65, %c0_66, %c0_67] : memref<4x32x16xbf16, #tpu.memory_space<vmem>>, vector<1x32x16xbf16>
    %111 = vector.shape_cast %110 : vector<1x32x16xbf16> to vector<32x16xbf16>
    %c3_68 = arith.constant 3 : index
    %c0_69 = arith.constant 0 : index
    %c0_70 = arith.constant 0 : index
    %112 = vector.load %arg5[%c3_68, %c0_69, %c0_70] : memref<4x16x32xbf16, #tpu.memory_space<vmem>>, vector<1x16x32xbf16>
    %113 = vector.shape_cast %112 : vector<1x16x32xbf16> to vector<16x32xbf16>
    %cst_71 = arith.constant dense<0.000000e+00> : vector<8x16xf32>
    %114 = tpu.matmul %2, %107, %cst_71 {dimension_numbers = #tpu.dot_dimension_numbers<[1], [0], [0], [1], [0, 0, 1, 1], [], []>} : vector<8x32xbf16>, vector<32x16xbf16>, vector<8x16xf32> -> vector<8x16xf32>
    %cst_72 = arith.constant dense<0.000000e+00> : vector<8x16xf32>
    %115 = tpu.matmul %2, %109, %cst_72 {dimension_numbers = #tpu.dot_dimension_numbers<[1], [0], [0], [1], [0, 0, 1, 1], [], []>} : vector<8x32xbf16>, vector<32x16xbf16>, vector<8x16xf32> -> vector<8x16xf32>
    %cst_73 = arith.constant dense<0.000000e+00> : vector<8x16xf32>
    %116 = tpu.matmul %2, %111, %cst_73 {dimension_numbers = #tpu.dot_dimension_numbers<[1], [0], [0], [1], [0, 0, 1, 1], [], []>} : vector<8x32xbf16>, vector<32x16xbf16>, vector<8x16xf32> -> vector<8x16xf32>
    %117 = arith.truncf %114 : vector<8x16xf32> to vector<8x16xbf16>
    %118 = vector.shape_cast %117 : vector<8x16xbf16> to vector<1x8x16xbf16>
    %119 = arith.truncf %115 : vector<8x16xf32> to vector<8x16xbf16>
    %120 = vector.shape_cast %119 : vector<8x16xbf16> to vector<1x8x16xbf16>
    %121 = arith.truncf %116 : vector<8x16xf32> to vector<8x16xbf16>
    %122 = vector.shape_cast %121 : vector<8x16xbf16> to vector<1x8x16xbf16>
    %cst_74 = arith.constant dense<0.000000e+00> : vector<1x8x8xf32>
    %123 = tpu.matmul %118, %120, %cst_74 {dimension_numbers = #tpu.dot_dimension_numbers<[2], [2], [1], [1], [0, 0, 0, 1, 1, 1], [0], [0]>} : vector<1x8x16xbf16>, vector<1x8x16xbf16>, vector<1x8x8xf32> -> vector<1x8x8xf32>
    %cst_75 = arith.constant dense<0xFF800000> : vector<1x8xf32>
    %124 = vector.multi_reduction <maximumf>, %123, %cst_75 [2] : vector<1x8x8xf32> to vector<1x8xf32>
    %125 = vector.shape_cast %124 : vector<1x8xf32> to vector<1x8x1xf32>
    %126 = vector.broadcast %125 : vector<1x8x1xf32> to vector<1x8x8xf32>
    %127 = arith.subf %123, %126 : vector<1x8x8xf32>
    %128 = math.exp %127 : vector<1x8x8xf32>
    %cst_76 = arith.constant dense<0.000000e+00> : vector<1x8xf32>
    %129 = vector.multi_reduction <add>, %128, %cst_76 [2] : vector<1x8x8xf32> to vector<1x8xf32>
    %130 = vector.shape_cast %129 : vector<1x8xf32> to vector<1x8x1xf32>
    %131 = tpu.reciprocal %130 {approx = true} : vector<1x8x1xf32> -> vector<1x8x1xf32>
    %132 = vector.broadcast %131 : vector<1x8x1xf32> to vector<1x8x8xf32>
    %133 = arith.mulf %128, %132 : vector<1x8x8xf32>
    %134 = arith.truncf %133 : vector<1x8x8xf32> to vector<1x8x8xbf16>
    %cst_77 = arith.constant dense<0.000000e+00> : vector<1x8x16xf32>
    %135 = tpu.matmul %134, %122, %cst_77 {dimension_numbers = #tpu.dot_dimension_numbers<[2], [1], [1], [2], [0, 0, 0, 1, 1, 2], [0], [0]>} : vector<1x8x8xbf16>, vector<1x8x16xbf16>, vector<1x8x16xf32> -> vector<1x8x16xf32>
    %136 = vector.shape_cast %135 : vector<1x8x16xf32> to vector<8x16xf32>
    %137 = arith.truncf %136 : vector<8x16xf32> to vector<8x16xbf16>
    %cst_78 = arith.constant dense<0.000000e+00> : vector<8x32xf32>
    %138 = tpu.matmul %137, %113, %cst_78 {dimension_numbers = #tpu.dot_dimension_numbers<[1], [0], [0], [1], [0, 0, 1, 1], [], []>} : vector<8x16xbf16>, vector<16x32xbf16>, vector<8x32xf32> -> vector<8x32xf32>
    %139 = arith.addf %105, %138 : vector<8x32xf32>
    %c0_79 = arith.constant 0 : index
    %c0_80 = arith.constant 0 : index
    %140 = vector.load %arg6[%c0_79, %c0_80] : memref<1x32xf32, #tpu.memory_space<vmem>>, vector<1x32xf32>
    %141 = vector.broadcast %140 : vector<1x32xf32> to vector<8x32xf32>
    %142 = arith.addf %139, %141 : vector<8x32xf32>
    %143 = vector.shape_cast %142 : vector<8x32xf32> to vector<1x8x32xf32>
    %c0_81 = arith.constant 0 : index
    %c0_82 = arith.constant 0 : index
    %c0_83 = arith.constant 0 : index
    %144 = vector.load %arg7[%c0_81, %c0_82, %c0_83] : memref<1x8x32xf32, #tpu.memory_space<vmem>>, vector<1x8x32xf32>
    tpu.vector_store %arg7[%c0_81, %c0_82, %c0_83], %143 {strides = array<i32>} : memref<1x8x32xf32, #tpu.memory_space<vmem>>, vector<1x8x32xf32>,
    return
  }
  func.func @transform_0(%arg0: i32) -> (i32, i32, i32) {
    %c0_i32 = arith.constant 0 : i32
    %c0_i32_0 = arith.constant 0 : i32
    %c0_i32_1 = arith.constant 0 : i32
    return %arg0, %c0_i32, %c0_i32_0 : i32, i32, i32
  }
  func.func @transform_1(%arg0: i32) -> (i32, i32, i32) {
    %c0_i32 = arith.constant 0 : i32
    %c0_i32_0 = arith.constant 0 : i32
    %c0_i32_1 = arith.constant 0 : i32
    %c0_i32_2 = arith.constant 0 : i32
    return %c0_i32, %c0_i32_0, %c0_i32_1 : i32, i32, i32
  }
  func.func @transform_2(%arg0: i32) -> (i32, i32, i32) {
    %c0_i32 = arith.constant 0 : i32
    %c0_i32_0 = arith.constant 0 : i32
    %c0_i32_1 = arith.constant 0 : i32
    %c0_i32_2 = arith.constant 0 : i32
    return %c0_i32, %c0_i32_0, %c0_i32_1 : i32, i32, i32
  }
  func.func @transform_3(%arg0: i32) -> (i32, i32, i32) {
    %c0_i32 = arith.constant 0 : i32
    %c0_i32_0 = arith.constant 0 : i32
    %c0_i32_1 = arith.constant 0 : i32
    %c0_i32_2 = arith.constant 0 : i32
    return %c0_i32, %c0_i32_0, %c0_i32_1 : i32, i32, i32
  }
  func.func @transform_4(%arg0: i32) -> (i32, i32, i32) {
    %c0_i32 = arith.constant 0 : i32
    %c0_i32_0 = arith.constant 0 : i32
    %c0_i32_1 = arith.constant 0 : i32
    %c0_i32_2 = arith.constant 0 : i32
    return %c0_i32, %c0_i32_0, %c0_i32_1 : i32, i32, i32
  }
  func.func @transform_5(%arg0: i32) -> (i32, i32) {
    %c0_i32 = arith.constant 0 : i32
    %c0_i32_0 = arith.constant 0 : i32
    %c0_i32_1 = arith.constant 0 : i32
    return %c0_i32, %c0_i32_0 : i32, i32
  }
  func.func @transform_6(%arg0: i32) -> (i32, i32, i32) {
    %c0_i32 = arith.constant 0 : i32
    %c0_i32_0 = arith.constant 0 : i32
    %c0_i32_1 = arith.constant 0 : i32
    return %arg0, %c0_i32, %c0_i32_0 : i32, i32, i32
  }
}

</mosaic_0001>

<llo_original>
// kernel: tpu_custom_call.1
$region0: #{tpu_custom_call.1}
  #allocation0 [shape = 'u32[]', space=smem, size = 0x4, offset = 0x4, fixed_abs, tag = 'smem constant byte address 0x4 - core index']
  #allocation1 [shape = 'u32[144,128]{1,0:T(1,128)}', space=vmem, size = 0x12000, scoped, tag = 'internal scratch']
  %s0 = inlined_call_operand.vmem [shape: f32[2,8,32], index: 0, kind: input, shape index: {}]
  %s1 = inlined_call_operand.vmem [shape: bf16[4,32,16], index: 1, kind: input, shape index: {}]
  %s2 = inlined_call_operand.vmem [shape: bf16[4,32,16], index: 2, kind: input, shape index: {}]
  %s3 = inlined_call_operand.vmem [shape: bf16[4,32,16], index: 3, kind: input, shape index: {}]
  %s4 = inlined_call_operand.vmem [shape: bf16[4,16,32], index: 4, kind: input, shape index: {}]
  %s5 = inlined_call_operand.vmem [shape: f32[1,32], index: 5, kind: input, shape index: {}]
  %s6 = inlined_call_operand.hbm [shape: f32[2,8,32], index: 6, kind: output, shape index: {}]
  %s7 = sld [smem:[#allocation0]]
  $region57: #{tpu_custom_call.1} parent=0
    _
  %s9 = ssub.s32 1, %s7
  %s10 = scalar_select 0, %s9, %s7
  $region1: #{tpu_custom_call.1} parent=0
    #allocation2 [shape = 'u8[8192]{0}', space=vmem, size = 0x2000, scoped, tag = 'output window, operand 0']
    #allocation3 [shape = 's32[2]{0}', space=sflag, size = 0x8, scoped, tag = 'scoped memory for tpu_custom_call.1']
    %11 = vsyncpa [#allocation3], 0
    %s12 = scalar_lea.sflag [#allocation3], 1
    %13 = vsyncpa %s12, 0
    loop: start=0, step=1, limit=4
    $region2: #{tpu_custom_call.1} parent=1 // loop_pre_header
      _
    $region3: #{tpu_custom_call.1} parent=1 // loop_header
      %s15 = sphi 0, %s19
      %p16 = scmp.ge.s32.totalorder %s15, 4
      %s25 = sphi 0, %s27
      %s28 = sphi 0, %s25
      %s29 = sphi 0, %s28
      %s45 = sphi 0, %s29
      %s49 = sphi 0, %s49
      %s51 = sphi 0, %s49
      %s52 = sphi 0, %s51
      %s66 = sphi 0, %s52
      %s70 = sphi 0, %s70
      %s72 = sphi 0, %s70
      %s73 = sphi 0, %s72
      %s87 = sphi 0, %s73
      %s91 = sphi 0, %s91
      %s93 = sphi 0, %s91
      %s94 = sphi 0, %s93
      %s108 = sphi 0, %s94
      %s112 = sphi 0, %s112
      %s114 = sphi 0, %s112
      %s115 = sphi 0, %s114
      %s129 = sphi 0, %s115
      %s133 = sphi 0, %s133
      %s135 = sphi 0, %s133
      %s136 = sphi 0, %s135
      %s150 = sphi 0, %s136
      %s156 = sphi 0, %s158
      %s159 = sphi 0, %s156
      %s160 = sphi 0, %s159
      %s176 = sphi 0, %s160
    $region4: #{tpu_custom_call.1} parent=1 // loop_header_branch
      %18 = sbr.rel (%p16) target = $region8
    $region5: #{tpu_custom_call.1} parent=1 // loop_body
      %s20 = ssub.s32 %s15, 1
      %s21 = ssub.s32 %s15, 2
      %s22 = sadd.s32 %s15, 1
      %s23 = ssub.s32 %s15, %s22
      %p24 = scmp.eq.s32.totalorder %s23, 0
      %s26 = sadd.s32 %s25, 1
      %s27 = scalar_select %p24, %s25, %s26
      %p30 = pneg %p24
      %p31 = scmp.eq.s32.totalorder %s15, 1
      %p32 = por %p30, %p31
      %p33 = scmp.ne.s32.totalorder %s25, %s28
      %p34 = scmp.eq.s32.totalorder %s15, 0
      %p35 = por %p33, %p34
      %p36 = scmp.ne.s32.totalorder %s25, %s28
      %p37 = scmp.eq.s32.totalorder %s20, 1
      %p38 = por %p36, %p37
      %p39 = scmp.ne.s32.totalorder %s28, %s29
      %p40 = scmp.eq.s32.totalorder %s20, 0
      %p41 = por %p39, %p40
      %p42 = scmp.ne.s32.totalorder %s28, %s29
      %p43 = scmp.eq.s32.totalorder %s21, 1
      %p44 = por %p42, %p43
      %p46 = scmp.ne.s32.totalorder %s29, %s45
      %p47 = scmp.eq.s32.totalorder %s21, 0
      %p48 = por %p46, %p47
      %s50 = sadd.s32 %s49, 1
      %p53 = scmp.eq.s32.totalorder %s15, 1
      %p54 = scmp.ne.s32.totalorder %s49, %s51
      %p55 = scmp.eq.s32.totalorder %s15, 0
      %p56 = por %p54, %p55
      %p57 = scmp.ne.s32.totalorder %s49, %s51
      %p58 = scmp.eq.s32.totalorder %s20, 1
      %p59 = por %p57, %p58
      %p60 = scmp.ne.s32.totalorder %s51, %s52
      %p61 = scmp.eq.s32.totalorder %s20, 0
      %p62 = por %p60, %p61
      %p63 = scmp.ne.s32.totalorder %s51, %s52
      %p64 = scmp.eq.s32.totalorder %s21, 1
      %p65 = por %p63, %p64
      %p67 = scmp.ne.s32.totalorder %s52, %s66
      %p68 = scmp.eq.s32.totalorder %s21, 0
      %p69 = por %p67, %p68
      %s71 = sadd.s32 %s70, 1
      %p74 = scmp.eq.s32.totalorder %s15, 1
      %p75 = scmp.ne.s32.totalorder %s70, %s72
      %p76 = scmp.eq.s32.totalorder %s15, 0
      %p77 = por %p75, %p76
      %p78 = scmp.ne.s32.totalorder %s70, %s72
      %p79 = scmp.eq.s32.totalorder %s20, 1
      %p80 = por %p78, %p79
      %p81 = scmp.ne.s32.totalorder %s72, %s73
      %p82 = scmp.eq.s32.totalorder %s20, 0
      %p83 = por %p81, %p82
      %p84 = scmp.ne.s32.totalorder %s72, %s73
      %p85 = scmp.eq.s32.totalorder %s21, 1
      %p86 = por %p84, %p85
      %p88 = scmp.ne.s32.totalorder %s73, %s87
      %p89 = scmp.eq.s32.totalorder %s21, 0
      %p90 = por %p88, %p89
      %s92 = sadd.s32 %s91, 1
      %p95 = scmp.eq.s32.totalorder %s15, 1
      %p96 = scmp.ne.s32.totalorder %s91, %s93
      %p97 = scmp.eq.s32.totalorder %s15, 0
      %p98 = por %p96, %p97
      %p99 = scmp.ne.s32.totalorder %s91, %s93
      %p100 = scmp.eq.s32.totalorder %s20, 1
      %p101 = por %p99, %p100
      %p102 = scmp.ne.s32.totalorder %s93, %s94
      %p103 = scmp.eq.s32.totalorder %s20, 0
      %p104 = por %p102, %p103
      %p105 = scmp.ne.s32.totalorder %s93, %s94
      %p106 = scmp.eq.s32.totalorder %s21, 1
      %p107 = por %p105, %p106
      %p109 = scmp.ne.s32.totalorder %s94, %s108
      %p110 = scmp.eq.s32.totalorder %s21, 0
      %p111 = por %p109, %p110
      %s113 = sadd.s32 %s112, 1
      %p116 = scmp.eq.s32.totalorder %s15, 1
      %p117 = scmp.ne.s32.totalorder %s112, %s114
      %p118 = scmp.eq.s32.totalorder %s15, 0
      %p119 = por %p117, %p118
      %p120 = scmp.ne.s32.totalorder %s112, %s114
      %p121 = scmp.eq.s32.totalorder %s20, 1
      %p122 = por %p120, %p121
      %p123 = scmp.ne.s32.totalorder %s114, %s115
      %p124 = scmp.eq.s32.totalorder %s20, 0
      %p125 = por %p123, %p124
      %p126 = scmp.ne.s32.totalorder %s114, %s115
      %p127 = scmp.eq.s32.totalorder %s21, 1
      %p128 = por %p126, %p127
      %p130 = scmp.ne.s32.totalorder %s115, %s129
      %p131 = scmp.eq.s32.totalorder %s21, 0
      %p132 = por %p130, %p131
      %s134 = sadd.s32 %s133, 1
      %p137 = scmp.eq.s32.totalorder %s15, 1
      %p138 = scmp.ne.s32.totalorder %s133, %s135
      %p139 = scmp.eq.s32.totalorder %s15, 0
      %p140 = por %p138, %p139
      %p141 = scmp.ne.s32.totalorder %s133, %s135
      %p142 = scmp.eq.s32.totalorder %s20, 1
      %p143 = por %p141, %p142
      %p144 = scmp.ne.s32.totalorder %s135, %s136
      %p145 = scmp.eq.s32.totalorder %s20, 0
      %p146 = por %p144, %p145
      %p147 = scmp.ne.s32.totalorder %s135, %s136
      %p148 = scmp.eq.s32.totalorder %s21, 1
      %p149 = por %p147, %p148
      %p151 = scmp.ne.s32.totalorder %s136, %s150
      %p152 = scmp.eq.s32.totalorder %s21, 0
      %p153 = por %p151, %p152
      %s154 = ssub.s32 %s15, %s22
      %p155 = scmp.eq.s32.totalorder %s154, 0
      %s157 = sadd.s32 %s156, 1
      %s158 = scalar_select %p155, %s156, %s157
      %p161 = pneg %p155
      %p162 = scmp.eq.s32.totalorder %s15, 1
      %p163 = por %p161, %p162
      %p164 = scmp.ne.s32.totalorder %s156, %s159
      %p165 = scmp.eq.s32.totalorder %s15, 0
      %p166 = por %p164, %p165
      %p167 = scmp.ne.s32.totalorder %s156, %s159
      %p168 = scmp.eq.s32.totalorder %s20, 1
      %p169 = por %p167, %p168
      %p170 = scmp.ne.s32.totalorder %s159, %s160
      %p171 = scmp.eq.s32.totalorder %s20, 0
      %p172 = por %p170, %p171
      %p173 = scmp.ne.s32.totalorder %s159, %s160
      %p174 = scmp.eq.s32.totalorder %s21, 1
      %p175 = por %p173, %p174
      %p177 = scmp.ne.s32.totalorder %s160, %s176
      %p178 = scmp.eq.s32.totalorder %s21, 0
      %p179 = por %p177, %p178
      %p180 = scmp.le.s32.totalorder 1, %s15
      %p181 = scmp.lt.s32.totalorder %s15, 3
      %p182 = pnand %p180, %p181
      %p183 = pneg %p182
      // Predicated region
      $region9: #{tpu_custom_call.1} parent=5 // pred_check
        _
      $region10: #{tpu_custom_call.1} parent=5 // pred_check_branch
        %185 = sbr.rel (%p182) target = $region12
      $region11: #{tpu_custom_call.1} parent=5 // pred_region
        %s186 = ssub.s32 %s15, 1
        // Predicated region
        $region13: #{tpu_custom_call.1} parent=11 // pred_check
          %p187 = pneg %p62
        $region14: #{tpu_custom_call.1} parent=11 // pred_check_branch
          %189 = sbr.rel (%p187) target = $region16
        $region15: #{tpu_custom_call.1} parent=11 // pred_region
          _
        $region16: #{tpu_custom_call.1} parent=11 // pred_fallthru
          _
        // Predicated region
        $region17: #{tpu_custom_call.1} parent=11 // pred_check
          %p190 = pneg %p83
        $region18: #{tpu_custom_call.1} parent=11 // pred_check_branch
          %192 = sbr.rel (%p190) target = $region20
        $region19: #{tpu_custom_call.1} parent=11 // pred_region
          _
        $region20: #{tpu_custom_call.1} parent=11 // pred_fallthru
          _
        // Predicated region
        $region21: #{tpu_custom_call.1} parent=11 // pred_check
          %p193 = pneg %p104
        $region22: #{tpu_custom_call.1} parent=11 // pred_check_branch
          %195 = sbr.rel (%p193) target = $region24
        $region23: #{tpu_custom_call.1} parent=11 // pred_region
          _
        $region24: #{tpu_custom_call.1} parent=11 // pred_fallthru
          _
        // Predicated region
        $region25: #{tpu_custom_call.1} parent=11 // pred_check
          %p196 = pneg %p125
        $region26: #{tpu_custom_call.1} parent=11 // pred_check_branch
          %198 = sbr.rel (%p196) target = $region28
        $region27: #{tpu_custom_call.1} parent=11 // pred_region
          _
        $region28: #{tpu_custom_call.1} parent=11 // pred_fallthru
          _
        // Predicated region
        $region29: #{tpu_custom_call.1} parent=11 // pred_check
          %p199 = pneg %p146
        $region30: #{tpu_custom_call.1} parent=11 // pred_check_branch
          %201 = sbr.rel (%p199) target = $region32
        $region31: #{tpu_custom_call.1} parent=11 // pred_region
          _
        $region32: #{tpu_custom_call.1} parent=11 // pred_fallthru
          _
      $region12: #{tpu_custom_call.1} parent=5 // pred_fallthru
        _
      %p202 = scmp.lt.s32.totalorder %s15, 2
      // Predicated region
      $region33: #{tpu_custom_call.1} parent=5 // pred_check
        %p203 = pneg %p202
      $region34: #{tpu_custom_call.1} parent=5 // pred_check_branch
        %205 = sbr.rel (%p203) target = $region36
      $region35: #{tpu_custom_call.1} parent=5 // pred_region
        // Predicated region
        $region37: #{tpu_custom_call.1} parent=35 // pred_check
          %p206 = pneg %p35
        $region38: #{tpu_custom_call.1} parent=35 // pred_check_branch
          %208 = sbr.rel (%p206) target = $region40
        $region39: #{tpu_custom_call.1} parent=35 // pred_region
          %p209 = scmp.lt.s32.totalorder %s15, 1
          %s210 = scalar_select %p209, %s15, 1
          %s211 = smul.addr %s210, 8
          %s212 = scalar_lea.vmem %s0, %s211
        $region40: #{tpu_custom_call.1} parent=35 // pred_fallthru
          _
      $region36: #{tpu_custom_call.1} parent=5 // pred_fallthru
        _
      %p213 = scmp.le.s32.totalorder 1, %s15
      %p214 = scmp.lt.s32.totalorder %s15, 3
      %p215 = pnand %p213, %p214
      %p216 = pneg %p215
      // Predicated region
      $region41: #{tpu_custom_call.1} parent=5 // pred_check
        _
      $region42: #{tpu_custom_call.1} parent=5 // pred_check_branch
        %218 = sbr.rel (%p215) target = $region44
      $region43: #{tpu_custom_call.1} parent=5 // pred_region
        %s219 = ssub.s32 %s15, 1
        %p220 = scmp.lt.s32.totalorder %s20, 1
        %s221 = scalar_select %p220, %s20, 1
        %s222 = smul.addr %s221, 8
        %s223 = scalar_lea.vmem %s0, %s222
        %p224 = pneg %p41
        %p225 = pneg %p38
        %p226 = pneg %p62
        %p227 = pneg %p59
        %p228 = pneg %p83
        %p229 = pneg %p80
        %p230 = pneg %p104
        %p231 = pneg %p101
        %p232 = pneg %p125
        %p233 = pneg %p122
        %p234 = pneg %p146
        %p235 = pneg %p143
        %p236 = pneg %p172
        %p237 = pneg %p169
        %s238 = sand.u32 %s159, 1
        %s239 = scalar_lea.sflag [#allocation3], %s238
        %s240 = sand.u32 %s159, 1
        %s241 = smul.addr %s240, 8
        %s242 = scalar_lea.vmem [#allocation2], %s241
        %p243 = scmp.lt.s32.totalorder %s20, 1
        %s244 = scalar_select %p243, %s20, 1
        %s245 = smul.addr %s244, 8
        %s246 = scalar_lea.vmem %s0, %s245
        %v248 = vld [vmem:[%s246] sm:$0xff]
        %v249 = vpack.c.bf16 %v248, %v248
        %v250 = vld [vmem:[%s1] sm:$0xf]
        %v251 = vld [vmem:[%s1 + $0x4] sm:$0xf]
        %v252 = vld [vmem:[%s1 + $0x8] sm:$0xf]
        %v253 = vld [vmem:[%s1 + $0xc] sm:$0xf]
        %v254 = vld [vmem:[%s2] sm:$0xf]
        %v255 = vld [vmem:[%s2 + $0x4] sm:$0xf]
        %v256 = vld [vmem:[%s2 + $0x8] sm:$0xf]
        %v257 = vld [vmem:[%s2 + $0xc] sm:$0xf]
        %v258 = vld [vmem:[%s3] sm:$0xf]
        %v259 = vld [vmem:[%s3 + $0x4] sm:$0xf]
        %v260 = vld [vmem:[%s3 + $0x8] sm:$0xf]
        %v261 = vld [vmem:[%s3 + $0xc] sm:$0xf]
        %v262 = vld [vmem:[%s4] sm:$0xf]
        %v263 = vld [vmem:[%s4 + $0x4] sm:$0xf]
        %v268 = vunpack.c.l.b16 %v250
        %v269 = vunpack.c.l.b16 %v251
        %v270 = vunpack.c.l.b16 %v252
        %v271 = vunpack.c.l.b16 %v253
        %v272 = vpack.c.b16 %v269, %v268
        %v273 = vpack.c.b16 %v271, %v270
        %vm276 = vcmask 261120
        %v278 = vsel %vm276, %v249, 0
        %280 = vmatprep.subr.bf16.mxu0 0
        %281 = vmatpush1.bf16.msra.mxu0 %v272
        %282 = vmatprep.subr.bf16.mxu0 0
        %283 = vmatpush1.bf16.msra.mxu0 %v273
        %284 = vmatprep.subr.bf16.mxu0 0
        %285 = vmatpush1.bf16.msra.mxu0 0
        %286 = vmatprep.subr.bf16.mxu0 0
        %287 = vmatpush1.bf16.msra.mxu0 0
        %288 = vmatprep.subr.bf16.mxu0 0
        %289 = vmatpush1.bf16.msra.mxu0 0
        %290 = vmatprep.subr.bf16.mxu0 0
        %291 = vmatpush1.bf16.msra.mxu0 0
        %292 = vmatprep.subr.bf16.mxu0 0
        %293 = vmatpush1.bf16.msra.mxu0 0
        %294 = vmatprep.subr.bf16.mxu0 0
        %295 = vmatpush1.bf16.msra.mxu0 0
        %296 = vmatprep.subr.bf16.mxu0 0
        %297 = vmatpush1.bf16.msra.mxu0 0
        %298 = vmatprep.subr.bf16.mxu0 0
        %299 = vmatpush1.bf16.msra.mxu0 0
        %300 = vmatprep.subr.bf16.mxu0 0
        %301 = vmatpush1.bf16.msra.mxu0 0
        %302 = vmatprep.subr.bf16.mxu0 0
        %303 = vmatpush1.bf16.msra.mxu0 0
        %304 = vmatprep.subr.bf16.mxu0 0
        %305 = vmatpush1.bf16.msra.mxu0 0
        %306 = vmatprep.subr.bf16.mxu0 0
        %307 = vmatpush1.bf16.msra.mxu0 0
        %308 = vmatprep.subr.bf16.mxu0 0
        %309 = vmatpush1.bf16.msra.mxu0 0
        %310 = vmatprep.subr.bf16.mxu0 0
        %311 = vmatpush1.bf16.msra.mxu0 0
        %312 = vmatprep.mubr.bf16.mxu0 0
        %313 = vmatmul.mubr.bf16.gmra.mrb[0].mxu0 %v278
        %v314 = vpop.f32.mrb[0].mxu0
        %v315 = vadd.f32 0.0, %v314
        %v316 = vpop.f32.mrb[0].mxu0
        %v317 = vpop.f32.mrb[0].mxu0
        %v318 = vpop.f32.mrb[0].mxu0
        %319 = vdwg.mxu0
        %v324 = vunpack.c.l.b16 %v254
        %v325 = vunpack.c.l.b16 %v255
        %v326 = vunpack.c.l.b16 %v256
        %v327 = vunpack.c.l.b16 %v257
        %v328 = vpack.c.b16 %v325, %v324
        %v329 = vpack.c.b16 %v327, %v326
        %332 = vmatprep.subr.bf16.mxu0 0
        %333 = vmatpush1.bf16.msra.mxu0 %v328
        %334 = vmatprep.subr.bf16.mxu0 0
        %335 = vmatpush1.bf16.msra.mxu0 %v329
        %336 = vmatprep.subr.bf16.mxu0 0
        %337 = vmatpush1.bf16.msra.mxu0 0
        %338 = vmatprep.subr.bf16.mxu0 0
        %339 = vmatpush1.bf16.msra.mxu0 0
        %340 = vmatprep.subr.bf16.mxu0 0
        %341 = vmatpush1.bf16.msra.mxu0 0
        %342 = vmatprep.subr.bf16.mxu0 0
        %343 = vmatpush1.bf16.msra.mxu0 0
        %344 = vmatprep.subr.bf16.mxu0 0
        %345 = vmatpush1.bf16.msra.mxu0 0
        %346 = vmatprep.subr.bf16.mxu0 0
        %347 = vmatpush1.bf16.msra.mxu0 0
        %348 = vmatprep.subr.bf16.mxu0 0
        %349 = vmatpush1.bf16.msra.mxu0 0
        %350 = vmatprep.subr.bf16.mxu0 0
        %351 = vmatpush1.bf16.msra.mxu0 0
        %352 = vmatprep.subr.bf16.mxu0 0
        %353 = vmatpush1.bf16.msra.mxu0 0
        %354 = vmatprep.subr.bf16.mxu0 0
        %355 = vmatpush1.bf16.msra.mxu0 0
        %356 = vmatprep.subr.bf16.mxu0 0
        %357 = vmatpush1.bf16.msra.mxu0 0
        %358 = vmatprep.subr.bf16.mxu0 0
        %359 = vmatpush1.bf16.msra.mxu0 0
        %360 = vmatprep.subr.bf16.mxu0 0
        %361 = vmatpush1.bf16.msra.mxu0 0
        %362 = vmatprep.subr.bf16.mxu0 0
        %363 = vmatpush1.bf16.msra.mxu0 0
        %364 = vmatprep.mubr.bf16.mxu0 0
        %365 = vmatmul.mubr.bf16.gmra.mrb[0].mxu0 %v278
        %v366 = vpop.f32.mrb[0].mxu0
        %v367 = vadd.f32 0.0, %v366
        %v368 = vpop.f32.mrb[0].mxu0
        %v369 = vpop.f32.mrb[0].mxu0
        %v370 = vpop.f32.mrb[0].mxu0
        %371 = vdwg.mxu0
        %v376 = vunpack.c.l.b16 %v258
        %v377 = vunpack.c.l.b16 %v259
        %v378 = vunpack.c.l.b16 %v260
        %v379 = vunpack.c.l.b16 %v261
        %v380 = vpack.c.b16 %v377, %v376
        %v381 = vpack.c.b16 %v379, %v378
        %384 = vmatprep.subr.bf16.mxu0 0
        %385 = vmatpush1.bf16.msra.mxu0 %v380
        %386 = vmatprep.subr.bf16.mxu0 0
        %387 = vmatpush1.bf16.msra.mxu0 %v381
        %388 = vmatprep.subr.bf16.mxu0 0
        %389 = vmatpush1.bf16.msra.mxu0 0
        %390 = vmatprep.subr.bf16.mxu0 0
        %391 = vmatpush1.bf16.msra.mxu0 0
        %392 = vmatprep.subr.bf16.mxu0 0
        %393 = vmatpush1.bf16.msra.mxu0 0
        %394 = vmatprep.subr.bf16.mxu0 0
        %395 = vmatpush1.bf16.msra.mxu0 0
        %396 = vmatprep.subr.bf16.mxu0 0
        %397 = vmatpush1.bf16.msra.mxu0 0
        %398 = vmatprep.subr.bf16.mxu0 0
        %399 = vmatpush1.bf16.msra.mxu0 0
        %400 = vmatprep.subr.bf16.mxu0 0
        %401 = vmatpush1.bf16.msra.mxu0 0
        %402 = vmatprep.subr.bf16.mxu0 0
        %403 = vmatpush1.bf16.msra.mxu0 0
        %404 = vmatprep.subr.bf16.mxu0 0
        %405 = vmatpush1.bf16.msra.mxu0 0
        %406 = vmatprep.subr.bf16.mxu0 0
        %407 = vmatpush1.bf16.msra.mxu0 0
        %408 = vmatprep.subr.bf16.mxu0 0
        %409 = vmatpush1.bf16.msra.mxu0 0
        %410 = vmatprep.subr.bf16.mxu0 0
        %411 = vmatpush1.bf16.msra.mxu0 0
        %412 = vmatprep.subr.bf16.mxu0 0
        %413 = vmatpush1.bf16.msra.mxu0 0
        %414 = vmatprep.subr.bf16.mxu0 0
        %415 = vmatpush1.bf16.msra.mxu0 0
        %416 = vmatprep.mubr.bf16.mxu0 0
        %417 = vmatmul.mubr.bf16.gmra.mrb[0].mxu0 %v278
        %v418 = vpop.f32.mrb[0].mxu0
        %v419 = vadd.f32 0.0, %v418
        %v420 = vpop.f32.mrb[0].mxu0
        %v421 = vpop.f32.mrb[0].mxu0
        %v422 = vpop.f32.mrb[0].mxu0
        %423 = vdwg.mxu0
        %v424 = vpack.c.bf16 %v315, %v315
        %v425 = vpack.c.bf16 %v367, %v367
        %v426 = vpack.c.bf16 %v419, %v419
        %vm427 = vcmask 130048
        %v429 = vsel %vm427, %v424, 0
        %v432 = vsel %vm427, %v425, 0
        %434 = vmatprep.subr.bf16.mxu0 0
        %435 = vmatpush1.bf16.xpose.msra.mxu0 %v432
        %436 = vmatprep.subr.bf16.mxu0 0
        %437 = vmatpush1.bf16.xpose.msra.mxu0 0
        %438 = vmatprep.subr.bf16.mxu0 0
        %439 = vmatpush1.bf16.xpose.msra.mxu0 0
        %440 = vmatprep.subr.bf16.mxu0 0
        %441 = vmatpush1.bf16.xpose.msra.mxu0 0
        %442 = vmatprep.subr.bf16.mxu0 0
        %443 = vmatpush1.bf16.xpose.msra.mxu0 0
        %444 = vmatprep.subr.bf16.mxu0 0
        %445 = vmatpush1.bf16.xpose.msra.mxu0 0
        %446 = vmatprep.subr.bf16.mxu0 0
        %447 = vmatpush1.bf16.xpose.msra.mxu0 0
        %448 = vmatprep.subr.bf16.mxu0 0
        %449 = vmatpush1.bf16.xpose.msra.mxu0 0
        %450 = vmatprep.subr.bf16.mxu0 0
        %451 = vmatpush1.bf16.xpose.msra.mxu0 0
        %452 = vmatprep.subr.bf16.mxu0 0
        %453 = vmatpush1.bf16.xpose.msra.mxu0 0
        %454 = vmatprep.subr.bf16.mxu0 0
        %455 = vmatpush1.bf16.xpose.msra.mxu0 0
        %456 = vmatprep.subr.bf16.mxu0 0
        %457 = vmatpush1.bf16.xpose.msra.mxu0 0
        %458 = vmatprep.subr.bf16.mxu0 0
        %459 = vmatpush1.bf16.xpose.msra.mxu0 0
        %460 = vmatprep.subr.bf16.mxu0 0
        %461 = vmatpush1.bf16.xpose.msra.mxu0 0
        %462 = vmatprep.subr.bf16.mxu0 0
        %463 = vmatpush1.bf16.xpose.msra.mxu0 0
        %464 = vmatprep.subr.bf16.mxu0 0
        %465 = vmatpush1.bf16.xpose.msra.mxu0 0
        %466 = vmatprep.mubr.bf16.mxu0 0
        %467 = vmatmul.mubr.bf16.gmra.mrb[0].mxu0 %v429
        %v468 = vpop.f32.mrb[0].mxu0
        %v469 = vadd.f32 0.0, %v468
        %v470 = vpop.f32.mrb[0].mxu0
        %v471 = vpop.f32.mrb[0].mxu0
        %v472 = vpop.f32.mrb[0].mxu0
        %473 = vdwg.mxu0
        %vm474 = vcmask 64512
        %v475 = vsel %vm474, %v469, -inf
        %476 = vmax.xlane.f32.xlu0 %v475
        %v477 = vpop.xlane.xlu0 %476
        %v478 = vsub.f32 %v469, %v477
        %v479 = vmul.f32 %v478, 1.442695
        %v480 = vpow.pop %v479
        %v481 = vsel %vm474, %v480, 0.0
        %482 = vadd.xlane.f32.xlu0 %v481
        %v483 = vpop.xlane.xlu0 %482
        %v484 = vrcp.pop %v483
        %v485 = vmul.f32 %v480, %v484
        %v486 = vpack.c.bf16 %v485, %v485
        %v488 = vsel %vm474, %v486, 0
        %vm490 = vcmask 1043456
        %v492 = vsel %vm490, %v426, 0
        %494 = vmatprep.subr.bf16.mxu0 0
        %495 = vmatpush1.bf16.msra.mxu0 %v492
        %496 = vmatprep.subr.bf16.mxu0 0
        %497 = vmatpush1.bf16.msra.mxu0 0
        %498 = vmatprep.subr.bf16.mxu0 0
        %499 = vmatpush1.bf16.msra.mxu0 0
        %500 = vmatprep.subr.bf16.mxu0 0
        %501 = vmatpush1.bf16.msra.mxu0 0
        %502 = vmatprep.subr.bf16.mxu0 0
        %503 = vmatpush1.bf16.msra.mxu0 0
        %504 = vmatprep.subr.bf16.mxu0 0
        %505 = vmatpush1.bf16.msra.mxu0 0
        %506 = vmatprep.subr.bf16.mxu0 0
        %507 = vmatpush1.bf16.msra.mxu0 0
        %508 = vmatprep.subr.bf16.mxu0 0
        %509 = vmatpush1.bf16.msra.mxu0 0
        %510 = vmatprep.subr.bf16.mxu0 0
        %511 = vmatpush1.bf16.msra.mxu0 0
        %512 = vmatprep.subr.bf16.mxu0 0
        %513 = vmatpush1.bf16.msra.mxu0 0
        %514 = vmatprep.subr.bf16.mxu0 0
        %515 = vmatpush1.bf16.msra.mxu0 0
        %516 = vmatprep.subr.bf16.mxu0 0
        %517 = vmatpush1.bf16.msra.mxu0 0
        %518 = vmatprep.subr.bf16.mxu0 0
        %519 = vmatpush1.bf16.msra.mxu0 0
        %520 = vmatprep.subr.bf16.mxu0 0
        %521 = vmatpush1.bf16.msra.mxu0 0
        %522 = vmatprep.subr.bf16.mxu0 0
        %523 = vmatpush1.bf16.msra.mxu0 0
        %524 = vmatprep.subr.bf16.mxu0 0
        %525 = vmatpush1.bf16.msra.mxu0 0
        %526 = vmatprep.mubr.bf16.mxu0 0
        %527 = vmatmul.mubr.bf16.gmra.mrb[0].mxu0 %v488
        %v528 = vpop.f32.mrb[0].mxu0
        %v529 = vadd.f32 0.0, %v528
        %v530 = vpop.f32.mrb[0].mxu0
        %v531 = vpop.f32.mrb[0].mxu0
        %v532 = vpop.f32.mrb[0].mxu0
        %533 = vdwg.mxu0
        %v534 = vpack.c.bf16 %v529, %v529
        %s535 = scalar_lea.vmem %s1, 16
        %v536 = vld [vmem:[%s535] sm:$0xf]
        %v537 = vld [vmem:[%s535 + $0x4] sm:$0xf]
        %v538 = vld [vmem:[%s535 + $0x8] sm:$0xf]
        %v539 = vld [vmem:[%s535 + $0xc] sm:$0xf]
        %s540 = scalar_lea.vmem %s2, 16
        %v541 = vld [vmem:[%s540] sm:$0xf]
        %v542 = vld [vmem:[%s540 + $0x4] sm:$0xf]
        %v543 = vld [vmem:[%s540 + $0x8] sm:$0xf]
        %v544 = vld [vmem:[%s540 + $0xc] sm:$0xf]
        %s545 = scalar_lea.vmem %s3, 16
        %v546 = vld [vmem:[%s545] sm:$0xf]
        %v547 = vld [vmem:[%s545 + $0x4] sm:$0xf]
        %v548 = vld [vmem:[%s545 + $0x8] sm:$0xf]
        %v549 = vld [vmem:[%s545 + $0xc] sm:$0xf]
        %s550 = scalar_lea.vmem %s4, 8
        %v551 = vld [vmem:[%s550] sm:$0xf]
        %v552 = vld [vmem:[%s550 + $0x4] sm:$0xf]
        %v557 = vunpack.c.l.b16 %v536
        %v558 = vunpack.c.l.b16 %v537
        %v559 = vunpack.c.l.b16 %v538
        %v560 = vunpack.c.l.b16 %v539
        %v561 = vpack.c.b16 %v558, %v557
        %v562 = vpack.c.b16 %v560, %v559
        %565 = vmatprep.subr.bf16.mxu0 0
        %566 = vmatpush1.bf16.msra.mxu0 %v561
        %567 = vmatprep.subr.bf16.mxu0 0
        %568 = vmatpush1.bf16.msra.mxu0 %v562
        %569 = vmatprep.subr.bf16.mxu0 0
        %570 = vmatpush1.bf16.msra.mxu0 0
        %571 = vmatprep.subr.bf16.mxu0 0
        %572 = vmatpush1.bf16.msra.mxu0 0
        %573 = vmatprep.subr.bf16.mxu0 0
        %574 = vmatpush1.bf16.msra.mxu0 0
        %575 = vmatprep.subr.bf16.mxu0 0
        %576 = vmatpush1.bf16.msra.mxu0 0
        %577 = vmatprep.subr.bf16.mxu0 0
        %578 = vmatpush1.bf16.msra.mxu0 0
        %579 = vmatprep.subr.bf16.mxu0 0
        %580 = vmatpush1.bf16.msra.mxu0 0
        %581 = vmatprep.subr.bf16.mxu0 0
        %582 = vmatpush1.bf16.msra.mxu0 0
        %583 = vmatprep.subr.bf16.mxu0 0
        %584 = vmatpush1.bf16.msra.mxu0 0
        %585 = vmatprep.subr.bf16.mxu0 0
        %586 = vmatpush1.bf16.msra.mxu0 0
        %587 = vmatprep.subr.bf16.mxu0 0
        %588 = vmatpush1.bf16.msra.mxu0 0
        %589 = vmatprep.subr.bf16.mxu0 0
        %590 = vmatpush1.bf16.msra.mxu0 0
        %591 = vmatprep.subr.bf16.mxu0 0
        %592 = vmatpush1.bf16.msra.mxu0 0
        %593 = vmatprep.subr.bf16.mxu0 0
        %594 = vmatpush1.bf16.msra.mxu0 0
        %595 = vmatprep.subr.bf16.mxu0 0
        %596 = vmatpush1.bf16.msra.mxu0 0
        %597 = vmatprep.mubr.bf16.mxu0 0
        %598 = vmatmul.mubr.bf16.gmra.mrb[0].mxu0 %v278
        %v599 = vpop.f32.mrb[0].mxu0
        %v600 = vadd.f32 0.0, %v599
        %v601 = vpop.f32.mrb[0].mxu0
        %v602 = vpop.f32.mrb[0].mxu0
        %v603 = vpop.f32.mrb[0].mxu0
        %604 = vdwg.mxu0
        %v609 = vunpack.c.l.b16 %v541
        %v610 = vunpack.c.l.b16 %v542
        %v611 = vunpack.c.l.b16 %v543
        %v612 = vunpack.c.l.b16 %v544
        %v613 = vpack.c.b16 %v610, %v609
        %v614 = vpack.c.b16 %v612, %v611
        %617 = vmatprep.subr.bf16.mxu0 0
        %618 = vmatpush1.bf16.msra.mxu0 %v613
        %619 = vmatprep.subr.bf16.mxu0 0
        %620 = vmatpush1.bf16.msra.mxu0 %v614
        %621 = vmatprep.subr.bf16.mxu0 0
        %622 = vmatpush1.bf16.msra.mxu0 0
        %623 = vmatprep.subr.bf16.mxu0 0
        %624 = vmatpush1.bf16.msra.mxu0 0
        %625 = vmatprep.subr.bf16.mxu0 0
        %626 = vmatpush1.bf16.msra.mxu0 0
        %627 = vmatprep.subr.bf16.mxu0 0
        %628 = vmatpush1.bf16.msra.mxu0 0
        %629 = vmatprep.subr.bf16.mxu0 0
        %630 = vmatpush1.bf16.msra.mxu0 0
        %631 = vmatprep.subr.bf16.mxu0 0
        %632 = vmatpush1.bf16.msra.mxu0 0
        %633 = vmatprep.subr.bf16.mxu0 0
        %634 = vmatpush1.bf16.msra.mxu0 0
        %635 = vmatprep.subr.bf16.mxu0 0
        %636 = vmatpush1.bf16.msra.mxu0 0
        %637 = vmatprep.subr.bf16.mxu0 0
        %638 = vmatpush1.bf16.msra.mxu0 0
        %639 = vmatprep.subr.bf16.mxu0 0
        %640 = vmatpush1.bf16.msra.mxu0 0
        %641 = vmatprep.subr.bf16.mxu0 0
        %642 = vmatpush1.bf16.msra.mxu0 0
        %643 = vmatprep.subr.bf16.mxu0 0
        %644 = vmatpush1.bf16.msra.mxu0 0
        %645 = vmatprep.subr.bf16.mxu0 0
        %646 = vmatpush1.bf16.msra.mxu0 0
        %647 = vmatprep.subr.bf16.mxu0 0
        %648 = vmatpush1.bf16.msra.mxu0 0
        %649 = vmatprep.mubr.bf16.mxu0 0
        %650 = vmatmul.mubr.bf16.gmra.mrb[0].mxu0 %v278
        %v651 = vpop.f32.mrb[0].mxu0
        %v652 = vadd.f32 0.0, %v651
        %v653 = vpop.f32.mrb[0].mxu0
        %v654 = vpop.f32.mrb[0].mxu0
        %v655 = vpop.f32.mrb[0].mxu0
        %656 = vdwg.mxu0
        %v661 = vunpack.c.l.b16 %v546
        %v662 = vunpack.c.l.b16 %v547
        %v663 = vunpack.c.l.b16 %v548
        %v664 = vunpack.c.l.b16 %v549
        %v665 = vpack.c.b16 %v662, %v661
        %v666 = vpack.c.b16 %v664, %v663
        %669 = vmatprep.subr.bf16.mxu0 0
        %670 = vmatpush1.bf16.msra.mxu0 %v665
        %671 = vmatprep.subr.bf16.mxu0 0
        %672 = vmatpush1.bf16.msra.mxu0 %v666
        %673 = vmatprep.subr.bf16.mxu0 0
        %674 = vmatpush1.bf16.msra.mxu0 0
        %675 = vmatprep.subr.bf16.mxu0 0
        %676 = vmatpush1.bf16.msra.mxu0 0
        %677 = vmatprep.subr.bf16.mxu0 0
        %678 = vmatpush1.bf16.msra.mxu0 0
        %679 = vmatprep.subr.bf16.mxu0 0
        %680 = vmatpush1.bf16.msra.mxu0 0
        %681 = vmatprep.subr.bf16.mxu0 0
        %682 = vmatpush1.bf16.msra.mxu0 0
        %683 = vmatprep.subr.bf16.mxu0 0
        %684 = vmatpush1.bf16.msra.mxu0 0
        %685 = vmatprep.subr.bf16.mxu0 0
        %686 = vmatpush1.bf16.msra.mxu0 0
        %687 = vmatprep.subr.bf16.mxu0 0
        %688 = vmatpush1.bf16.msra.mxu0 0
        %689 = vmatprep.subr.bf16.mxu0 0
        %690 = vmatpush1.bf16.msra.mxu0 0
        %691 = vmatprep.subr.bf16.mxu0 0
        %692 = vmatpush1.bf16.msra.mxu0 0
        %693 = vmatprep.subr.bf16.mxu0 0
        %694 = vmatpush1.bf16.msra.mxu0 0
        %695 = vmatprep.subr.bf16.mxu0 0
        %696 = vmatpush1.bf16.msra.mxu0 0
        %697 = vmatprep.subr.bf16.mxu0 0
        %698 = vmatpush1.bf16.msra.mxu0 0
        %699 = vmatprep.subr.bf16.mxu0 0
        %700 = vmatpush1.bf16.msra.mxu0 0
        %701 = vmatprep.mubr.bf16.mxu0 0
        %702 = vmatmul.mubr.bf16.gmra.mrb[0].mxu0 %v278
        %v703 = vpop.f32.mrb[0].mxu0
        %v704 = vadd.f32 0.0, %v703
        %v705 = vpop.f32.mrb[0].mxu0
        %v706 = vpop.f32.mrb[0].mxu0
        %v707 = vpop.f32.mrb[0].mxu0
        %708 = vdwg.mxu0
        %v709 = vpack.c.bf16 %v600, %v600
        %v710 = vpack.c.bf16 %v652, %v652
        %v711 = vpack.c.bf16 %v704, %v704
        %v713 = vsel %vm427, %v709, 0
        %v716 = vsel %vm427, %v710, 0
        %718 = vmatprep.subr.bf16.mxu0 0
        %719 = vmatpush1.bf16.xpose.msra.mxu0 %v716
        %720 = vmatprep.subr.bf16.mxu0 0
        %721 = vmatpush1.bf16.xpose.msra.mxu0 0
        %722 = vmatprep.subr.bf16.mxu0 0
        %723 = vmatpush1.bf16.xpose.msra.mxu0 0
        %724 = vmatprep.subr.bf16.mxu0 0
        %725 = vmatpush1.bf16.xpose.msra.mxu0 0
        %726 = vmatprep.subr.bf16.mxu0 0
        %727 = vmatpush1.bf16.xpose.msra.mxu0 0
        %728 = vmatprep.subr.bf16.mxu0 0
        %729 = vmatpush1.bf16.xpose.msra.mxu0 0
        %730 = vmatprep.subr.bf16.mxu0 0
        %731 = vmatpush1.bf16.xpose.msra.mxu0 0
        %732 = vmatprep.subr.bf16.mxu0 0
        %733 = vmatpush1.bf16.xpose.msra.mxu0 0
        %734 = vmatprep.subr.bf16.mxu0 0
        %735 = vmatpush1.bf16.xpose.msra.mxu0 0
        %736 = vmatprep.subr.bf16.mxu0 0
        %737 = vmatpush1.bf16.xpose.msra.mxu0 0
        %738 = vmatprep.subr.bf16.mxu0 0
        %739 = vmatpush1.bf16.xpose.msra.mxu0 0
        %740 = vmatprep.subr.bf16.mxu0 0
        %741 = vmatpush1.bf16.xpose.msra.mxu0 0
        %742 = vmatprep.subr.bf16.mxu0 0
        %743 = vmatpush1.bf16.xpose.msra.mxu0 0
        %744 = vmatprep.subr.bf16.mxu0 0
        %745 = vmatpush1.bf16.xpose.msra.mxu0 0
        %746 = vmatprep.subr.bf16.mxu0 0
        %747 = vmatpush1.bf16.xpose.msra.mxu0 0
        %748 = vmatprep.subr.bf16.mxu0 0
        %749 = vmatpush1.bf16.xpose.msra.mxu0 0
        %750 = vmatprep.mubr.bf16.mxu0 0
        %751 = vmatmul.mubr.bf16.gmra.mrb[0].mxu0 %v713
        %v752 = vpop.f32.mrb[0].mxu0
        %v753 = vadd.f32 0.0, %v752
        %v754 = vpop.f32.mrb[0].mxu0
        %v755 = vpop.f32.mrb[0].mxu0
        %v756 = vpop.f32.mrb[0].mxu0
        %757 = vdwg.mxu0
        %v758 = vsel %vm474, %v753, -inf
        %759 = vmax.xlane.f32.xlu0 %v758
        %v760 = vpop.xlane.xlu0 %759
        %v761 = vsub.f32 %v753, %v760
        %v762 = vmul.f32 %v761, 1.442695
        %v763 = vpow.pop %v762
        %v764 = vsel %vm474, %v763, 0.0
        %765 = vadd.xlane.f32.xlu0 %v764
        %v766 = vpop.xlane.xlu0 %765
        %v767 = vrcp.pop %v766
        %v768 = vmul.f32 %v763, %v767
        %v769 = vpack.c.bf16 %v768, %v768
        %v771 = vsel %vm474, %v769, 0
        %v774 = vsel %vm490, %v711, 0
        %776 = vmatprep.subr.bf16.mxu0 0
        %777 = vmatpush1.bf16.msra.mxu0 %v774
        %778 = vmatprep.subr.bf16.mxu0 0
        %779 = vmatpush1.bf16.msra.mxu0 0
        %780 = vmatprep.subr.bf16.mxu0 0
        %781 = vmatpush1.bf16.msra.mxu0 0
        %782 = vmatprep.subr.bf16.mxu0 0
        %783 = vmatpush1.bf16.msra.mxu0 0
        %784 = vmatprep.subr.bf16.mxu0 0
        %785 = vmatpush1.bf16.msra.mxu0 0
        %786 = vmatprep.subr.bf16.mxu0 0
        %787 = vmatpush1.bf16.msra.mxu0 0
        %788 = vmatprep.subr.bf16.mxu0 0
        %789 = vmatpush1.bf16.msra.mxu0 0
        %790 = vmatprep.subr.bf16.mxu0 0
        %791 = vmatpush1.bf16.msra.mxu0 0
        %792 = vmatprep.subr.bf16.mxu0 0
        %793 = vmatpush1.bf16.msra.mxu0 0
        %794 = vmatprep.subr.bf16.mxu0 0
        %795 = vmatpush1.bf16.msra.mxu0 0
        %796 = vmatprep.subr.bf16.mxu0 0
        %797 = vmatpush1.bf16.msra.mxu0 0
        %798 = vmatprep.subr.bf16.mxu0 0
        %799 = vmatpush1.bf16.msra.mxu0 0
        %800 = vmatprep.subr.bf16.mxu0 0
        %801 = vmatpush1.bf16.msra.mxu0 0
        %802 = vmatprep.subr.bf16.mxu0 0
        %803 = vmatpush1.bf16.msra.mxu0 0
        %804 = vmatprep.subr.bf16.mxu0 0
        %805 = vmatpush1.bf16.msra.mxu0 0
        %806 = vmatprep.subr.bf16.mxu0 0
        %807 = vmatpush1.bf16.msra.mxu0 0
        %808 = vmatprep.mubr.bf16.mxu0 0
        %809 = vmatmul.mubr.bf16.gmra.mrb[0].mxu0 %v771
        %v810 = vpop.f32.mrb[0].mxu0
        %v811 = vadd.f32 0.0, %v810
        %v812 = vpop.f32.mrb[0].mxu0
        %v813 = vpop.f32.mrb[0].mxu0
        %v814 = vpop.f32.mrb[0].mxu0
        %815 = vdwg.mxu0
        %v816 = vpack.c.bf16 %v811, %v811
        %v819 = vunpack.c.l.b16 %v551
        %v820 = vunpack.c.l.b16 %v552
        %v821 = vpack.c.b16 %v820, %v819
        %v824 = vsel %vm427, %v816, 0
        %826 = vmatprep.subr.bf16.mxu0 0
        %827 = vmatpush1.bf16.msra.mxu0 %v821
        %828 = vmatprep.subr.bf16.mxu0 0
        %829 = vmatpush1.bf16.msra.mxu0 0
        %830 = vmatprep.subr.bf16.mxu0 0
        %831 = vmatpush1.bf16.msra.mxu0 0
        %832 = vmatprep.subr.bf16.mxu0 0
        %833 = vmatpush1.bf16.msra.mxu0 0
        %834 = vmatprep.subr.bf16.mxu0 0
        %835 = vmatpush1.bf16.msra.mxu0 0
        %836 = vmatprep.subr.bf16.mxu0 0
        %837 = vmatpush1.bf16.msra.mxu0 0
        %838 = vmatprep.subr.bf16.mxu0 0
        %839 = vmatpush1.bf16.msra.mxu0 0
        %840 = vmatprep.subr.bf16.mxu0 0
        %841 = vmatpush1.bf16.msra.mxu0 0
        %842 = vmatprep.subr.bf16.mxu0 0
        %843 = vmatpush1.bf16.msra.mxu0 0
        %844 = vmatprep.subr.bf16.mxu0 0
        %845 = vmatpush1.bf16.msra.mxu0 0
        %846 = vmatprep.subr.bf16.mxu0 0
        %847 = vmatpush1.bf16.msra.mxu0 0
        %848 = vmatprep.subr.bf16.mxu0 0
        %849 = vmatpush1.bf16.msra.mxu0 0
        %850 = vmatprep.subr.bf16.mxu0 0
        %851 = vmatpush1.bf16.msra.mxu0 0
        %852 = vmatprep.subr.bf16.mxu0 0
        %853 = vmatpush1.bf16.msra.mxu0 0
        %854 = vmatprep.subr.bf16.mxu0 0
        %855 = vmatpush1.bf16.msra.mxu0 0
        %856 = vmatprep.subr.bf16.mxu0 0
        %857 = vmatpush1.bf16.msra.mxu0 0
        %858 = vmatprep.mubr.bf16.mxu0 0
        %859 = vmatmul.mubr.bf16.gmra.mrb[0].mxu0 %v824
        %v860 = vpop.f32.mrb[0].mxu0
        %v861 = vadd.f32 0.0, %v860
        %v862 = vpop.f32.mrb[0].mxu0
        %v863 = vpop.f32.mrb[0].mxu0
        %v864 = vpop.f32.mrb[0].mxu0
        %865 = vdwg.mxu0
        %v868 = vunpack.c.l.b16 %v262
        %v869 = vunpack.c.l.b16 %v263
        %v870 = vpack.c.b16 %v869, %v868
        %v873 = vsel %vm427, %v534, 0
        %875 = vmatprep.subr.bf16.mxu0 0
        %876 = vmatpush1.bf16.msra.mxu0 %v870
        %877 = vmatprep.subr.bf16.mxu0 0
        %878 = vmatpush1.bf16.msra.mxu0 0
        %879 = vmatprep.subr.bf16.mxu0 0
        %880 = vmatpush1.bf16.msra.mxu0 0
        %881 = vmatprep.subr.bf16.mxu0 0
        %882 = vmatpush1.bf16.msra.mxu0 0
        %883 = vmatprep.subr.bf16.mxu0 0
        %884 = vmatpush1.bf16.msra.mxu0 0
        %885 = vmatprep.subr.bf16.mxu0 0
        %886 = vmatpush1.bf16.msra.mxu0 0
        %887 = vmatprep.subr.bf16.mxu0 0
        %888 = vmatpush1.bf16.msra.mxu0 0
        %889 = vmatprep.subr.bf16.mxu0 0
        %890 = vmatpush1.bf16.msra.mxu0 0
        %891 = vmatprep.subr.bf16.mxu0 0
        %892 = vmatpush1.bf16.msra.mxu0 0
        %893 = vmatprep.subr.bf16.mxu0 0
        %894 = vmatpush1.bf16.msra.mxu0 0
        %895 = vmatprep.subr.bf16.mxu0 0
        %896 = vmatpush1.bf16.msra.mxu0 0
        %897 = vmatprep.subr.bf16.mxu0 0
        %898 = vmatpush1.bf16.msra.mxu0 0
        %899 = vmatprep.subr.bf16.mxu0 0
        %900 = vmatpush1.bf16.msra.mxu0 0
        %901 = vmatprep.subr.bf16.mxu0 0
        %902 = vmatpush1.bf16.msra.mxu0 0
        %903 = vmatprep.subr.bf16.mxu0 0
        %904 = vmatpush1.bf16.msra.mxu0 0
        %905 = vmatprep.subr.bf16.mxu0 0
        %906 = vmatpush1.bf16.msra.mxu0 0
        %907 = vmatprep.mubr.bf16.mxu0 0
        %908 = vmatmul.mubr.bf16.gmra.mrb[0].mxu0 %v873
        %v909 = vpop.f32.mrb[0].mxu0
        %v910 = vadd.f32 %v861, %v909
        %v911 = vpop.f32.mrb[0].mxu0
        %v912 = vpop.f32.mrb[0].mxu0
        %v913 = vpop.f32.mrb[0].mxu0
        %914 = vdwg.mxu0
        %s915 = scalar_lea.vmem %s1, 32
        %v916 = vld [vmem:[%s915] sm:$0xf]
        %v917 = vld [vmem:[%s915 + $0x4] sm:$0xf]
        %v918 = vld [vmem:[%s915 + $0x8] sm:$0xf]
        %v919 = vld [vmem:[%s915 + $0xc] sm:$0xf]
        %s920 = scalar_lea.vmem %s2, 32
        %v921 = vld [vmem:[%s920] sm:$0xf]
        %v922 = vld [vmem:[%s920 + $0x4] sm:$0xf]
        %v923 = vld [vmem:[%s920 + $0x8] sm:$0xf]
        %v924 = vld [vmem:[%s920 + $0xc] sm:$0xf]
        %s925 = scalar_lea.vmem %s3, 32
        %v926 = vld [vmem:[%s925] sm:$0xf]
        %v927 = vld [vmem:[%s925 + $0x4] sm:$0xf]
        %v928 = vld [vmem:[%s925 + $0x8] sm:$0xf]
        %v929 = vld [vmem:[%s925 + $0xc] sm:$0xf]
        %s930 = scalar_lea.vmem %s4, 16
        %v931 = vld [vmem:[%s930] sm:$0xf]
        %v932 = vld [vmem:[%s930 + $0x4] sm:$0xf]
        %v937 = vunpack.c.l.b16 %v916
        %v938 = vunpack.c.l.b16 %v917
        %v939 = vunpack.c.l.b16 %v918
        %v940 = vunpack.c.l.b16 %v919
        %v941 = vpack.c.b16 %v938, %v937
        %v942 = vpack.c.b16 %v940, %v939
        %945 = vmatprep.subr.bf16.mxu0 0
        %946 = vmatpush1.bf16.msra.mxu0 %v941
        %947 = vmatprep.subr.bf16.mxu0 0
        %948 = vmatpush1.bf16.msra.mxu0 %v942
        %949 = vmatprep.subr.bf16.mxu0 0
        %950 = vmatpush1.bf16.msra.mxu0 0
        %951 = vmatprep.subr.bf16.mxu0 0
        %952 = vmatpush1.bf16.msra.mxu0 0
        %953 = vmatprep.subr.bf16.mxu0 0
        %954 = vmatpush1.bf16.msra.mxu0 0
        %955 = vmatprep.subr.bf16.mxu0 0
        %956 = vmatpush1.bf16.msra.mxu0 0
        %957 = vmatprep.subr.bf16.mxu0 0
        %958 = vmatpush1.bf16.msra.mxu0 0
        %959 = vmatprep.subr.bf16.mxu0 0
        %960 = vmatpush1.bf16.msra.mxu0 0
        %961 = vmatprep.subr.bf16.mxu0 0
        %962 = vmatpush1.bf16.msra.mxu0 0
        %963 = vmatprep.subr.bf16.mxu0 0
        %964 = vmatpush1.bf16.msra.mxu0 0
        %965 = vmatprep.subr.bf16.mxu0 0
        %966 = vmatpush1.bf16.msra.mxu0 0
        %967 = vmatprep.subr.bf16.mxu0 0
        %968 = vmatpush1.bf16.msra.mxu0 0
        %969 = vmatprep.subr.bf16.mxu0 0
        %970 = vmatpush1.bf16.msra.mxu0 0
        %971 = vmatprep.subr.bf16.mxu0 0
        %972 = vmatpush1.bf16.msra.mxu0 0
        %973 = vmatprep.subr.bf16.mxu0 0
        %974 = vmatpush1.bf16.msra.mxu0 0
        %975 = vmatprep.subr.bf16.mxu0 0
        %976 = vmatpush1.bf16.msra.mxu0 0
        %977 = vmatprep.mubr.bf16.mxu0 0
        %978 = vmatmul.mubr.bf16.gmra.mrb[0].mxu0 %v278
        %v979 = vpop.f32.mrb[0].mxu0
        %v980 = vadd.f32 0.0, %v979
        %v981 = vpop.f32.mrb[0].mxu0
        %v982 = vpop.f32.mrb[0].mxu0
        %v983 = vpop.f32.mrb[0].mxu0
        %984 = vdwg.mxu0
        %v989 = vunpack.c.l.b16 %v921
        %v990 = vunpack.c.l.b16 %v922
        %v991 = vunpack.c.l.b16 %v923
        %v992 = vunpack.c.l.b16 %v924
        %v993 = vpack.c.b16 %v990, %v989
        %v994 = vpack.c.b16 %v992, %v991
        %997 = vmatprep.subr.bf16.mxu0 0
        %998 = vmatpush1.bf16.msra.mxu0 %v993
        %999 = vmatprep.subr.bf16.mxu0 0
        %1000 = vmatpush1.bf16.msra.mxu0 %v994
        %1001 = vmatprep.subr.bf16.mxu0 0
        %1002 = vmatpush1.bf16.msra.mxu0 0
        %1003 = vmatprep.subr.bf16.mxu0 0
        %1004 = vmatpush1.bf16.msra.mxu0 0
        %1005 = vmatprep.subr.bf16.mxu0 0
        %1006 = vmatpush1.bf16.msra.mxu0 0
        %1007 = vmatprep.subr.bf16.mxu0 0
        %1008 = vmatpush1.bf16.msra.mxu0 0
        %1009 = vmatprep.subr.bf16.mxu0 0
        %1010 = vmatpush1.bf16.msra.mxu0 0
        %1011 = vmatprep.subr.bf16.mxu0 0
        %1012 = vmatpush1.bf16.msra.mxu0 0
        %1013 = vmatprep.subr.bf16.mxu0 0
        %1014 = vmatpush1.bf16.msra.mxu0 0
        %1015 = vmatprep.subr.bf16.mxu0 0
        %1016 = vmatpush1.bf16.msra.mxu0 0
        %1017 = vmatprep.subr.bf16.mxu0 0
        %1018 = vmatpush1.bf16.msra.mxu0 0
        %1019 = vmatprep.subr.bf16.mxu0 0
        %1020 = vmatpush1.bf16.msra.mxu0 0
        %1021 = vmatprep.subr.bf16.mxu0 0
        %1022 = vmatpush1.bf16.msra.mxu0 0
        %1023 = vmatprep.subr.bf16.mxu0 0
        %1024 = vmatpush1.bf16.msra.mxu0 0
        %1025 = vmatprep.subr.bf16.mxu0 0
        %1026 = vmatpush1.bf16.msra.mxu0 0
        %1027 = vmatprep.subr.bf16.mxu0 0
        %1028 = vmatpush1.bf16.msra.mxu0 0
        %1029 = vmatprep.mubr.bf16.mxu0 0
        %1030 = vmatmul.mubr.bf16.gmra.mrb[0].mxu0 %v278
        %v1031 = vpop.f32.mrb[0].mxu0
        %v1032 = vadd.f32 0.0, %v1031
        %v1033 = vpop.f32.mrb[0].mxu0
        %v1034 = vpop.f32.mrb[0].mxu0
        %v1035 = vpop.f32.mrb[0].mxu0
        %1036 = vdwg.mxu0
        %v1041 = vunpack.c.l.b16 %v926
        %v1042 = vunpack.c.l.b16 %v927
        %v1043 = vunpack.c.l.b16 %v928
        %v1044 = vunpack.c.l.b16 %v929
        %v1045 = vpack.c.b16 %v1042, %v1041
        %v1046 = vpack.c.b16 %v1044, %v1043
        %1049 = vmatprep.subr.bf16.mxu0 0
        %1050 = vmatpush1.bf16.msra.mxu0 %v1045
        %1051 = vmatprep.subr.bf16.mxu0 0
        %1052 = vmatpush1.bf16.msra.mxu0 %v1046
        %1053 = vmatprep.subr.bf16.mxu0 0
        %1054 = vmatpush1.bf16.msra.mxu0 0
        %1055 = vmatprep.subr.bf16.mxu0 0
        %1056 = vmatpush1.bf16.msra.mxu0 0
        %1057 = vmatprep.subr.bf16.mxu0 0
        %1058 = vmatpush1.bf16.msra.mxu0 0
        %1059 = vmatprep.subr.bf16.mxu0 0
        %1060 = vmatpush1.bf16.msra.mxu0 0
        %1061 = vmatprep.subr.bf16.mxu0 0
        %1062 = vmatpush1.bf16.msra.mxu0 0
        %1063 = vmatprep.subr.bf16.mxu0 0
        %1064 = vmatpush1.bf16.msra.mxu0 0
        %1065 = vmatprep.subr.bf16.mxu0 0
        %1066 = vmatpush1.bf16.msra.mxu0 0
        %1067 = vmatprep.subr.bf16.mxu0 0
        %1068 = vmatpush1.bf16.msra.mxu0 0
        %1069 = vmatprep.subr.bf16.mxu0 0
        %1070 = vmatpush1.bf16.msra.mxu0 0
        %1071 = vmatprep.subr.bf16.mxu0 0
        %1072 = vmatpush1.bf16.msra.mxu0 0
        %1073 = vmatprep.subr.bf16.mxu0 0
        %1074 = vmatpush1.bf16.msra.mxu0 0
        %1075 = vmatprep.subr.bf16.mxu0 0
        %1076 = vmatpush1.bf16.msra.mxu0 0
        %1077 = vmatprep.subr.bf16.mxu0 0
        %1078 = vmatpush1.bf16.msra.mxu0 0
        %1079 = vmatprep.subr.bf16.mxu0 0
        %1080 = vmatpush1.bf16.msra.mxu0 0
        %1081 = vmatprep.mubr.bf16.mxu0 0
        %1082 = vmatmul.mubr.bf16.gmra.mrb[0].mxu0 %v278
        %v1083 = vpop.f32.mrb[0].mxu0
        %v1084 = vadd.f32 0.0, %v1083
        %v1085 = vpop.f32.mrb[0].mxu0
        %v1086 = vpop.f32.mrb[0].mxu0
        %v1087 = vpop.f32.mrb[0].mxu0
        %1088 = vdwg.mxu0
        %v1089 = vpack.c.bf16 %v980, %v980
        %v1090 = vpack.c.bf16 %v1032, %v1032
        %v1091 = vpack.c.bf16 %v1084, %v1084
        %v1093 = vsel %vm427, %v1089, 0
        %v1096 = vsel %vm427, %v1090, 0
        %1098 = vmatprep.subr.bf16.mxu0 0
        %1099 = vmatpush1.bf16.xpose.msra.mxu0 %v1096
        %1100 = vmatprep.subr.bf16.mxu0 0
        %1101 = vmatpush1.bf16.xpose.msra.mxu0 0
        %1102 = vmatprep.subr.bf16.mxu0 0
        %1103 = vmatpush1.bf16.xpose.msra.mxu0 0
        %1104 = vmatprep.subr.bf16.mxu0 0
        %1105 = vmatpush1.bf16.xpose.msra.mxu0 0
        %1106 = vmatprep.subr.bf16.mxu0 0
        %1107 = vmatpush1.bf16.xpose.msra.mxu0 0
        %1108 = vmatprep.subr.bf16.mxu0 0
        %1109 = vmatpush1.bf16.xpose.msra.mxu0 0
        %1110 = vmatprep.subr.bf16.mxu0 0
        %1111 = vmatpush1.bf16.xpose.msra.mxu0 0
        %1112 = vmatprep.subr.bf16.mxu0 0
        %1113 = vmatpush1.bf16.xpose.msra.mxu0 0
        %1114 = vmatprep.subr.bf16.mxu0 0
        %1115 = vmatpush1.bf16.xpose.msra.mxu0 0
        %1116 = vmatprep.subr.bf16.mxu0 0
        %1117 = vmatpush1.bf16.xpose.msra.mxu0 0
        %1118 = vmatprep.subr.bf16.mxu0 0
        %1119 = vmatpush1.bf16.xpose.msra.mxu0 0
        %1120 = vmatprep.subr.bf16.mxu0 0
        %1121 = vmatpush1.bf16.xpose.msra.mxu0 0
        %1122 = vmatprep.subr.bf16.mxu0 0
        %1123 = vmatpush1.bf16.xpose.msra.mxu0 0
        %1124 = vmatprep.subr.bf16.mxu0 0
        %1125 = vmatpush1.bf16.xpose.msra.mxu0 0
        %1126 = vmatprep.subr.bf16.mxu0 0
        %1127 = vmatpush1.bf16.xpose.msra.mxu0 0
        %1128 = vmatprep.subr.bf16.mxu0 0
        %1129 = vmatpush1.bf16.xpose.msra.mxu0 0
        %1130 = vmatprep.mubr.bf16.mxu0 0
        %1131 = vmatmul.mubr.bf16.gmra.mrb[0].mxu0 %v1093
        %v1132 = vpop.f32.mrb[0].mxu0
        %v1133 = vadd.f32 0.0, %v1132
        %v1134 = vpop.f32.mrb[0].mxu0
        %v1135 = vpop.f32.mrb[0].mxu0
        %v1136 = vpop.f32.mrb[0].mxu0
        %1137 = vdwg.mxu0
        %v1138 = vsel %vm474, %v1133, -inf
        %1139 = vmax.xlane.f32.xlu0 %v1138
        %v1140 = vpop.xlane.xlu0 %1139
        %v1141 = vsub.f32 %v1133, %v1140
        %v1142 = vmul.f32 %v1141, 1.442695
        %v1143 = vpow.pop %v1142
        %v1144 = vsel %vm474, %v1143, 0.0
        %1145 = vadd.xlane.f32.xlu0 %v1144
        %v1146 = vpop.xlane.xlu0 %1145
        %v1147 = vrcp.pop %v1146
        %v1148 = vmul.f32 %v1143, %v1147
        %v1149 = vpack.c.bf16 %v1148, %v1148
        %v1151 = vsel %vm474, %v1149, 0
        %v1154 = vsel %vm490, %v1091, 0
        %1156 = vmatprep.subr.bf16.mxu0 0
        %1157 = vmatpush1.bf16.msra.mxu0 %v1154
        %1158 = vmatprep.subr.bf16.mxu0 0
        %1159 = vmatpush1.bf16.msra.mxu0 0
        %1160 = vmatprep.subr.bf16.mxu0 0
        %1161 = vmatpush1.bf16.msra.mxu0 0
        %1162 = vmatprep.subr.bf16.mxu0 0
        %1163 = vmatpush1.bf16.msra.mxu0 0
        %1164 = vmatprep.subr.bf16.mxu0 0
        %1165 = vmatpush1.bf16.msra.mxu0 0
        %1166 = vmatprep.subr.bf16.mxu0 0
        %1167 = vmatpush1.bf16.msra.mxu0 0
        %1168 = vmatprep.subr.bf16.mxu0 0
        %1169 = vmatpush1.bf16.msra.mxu0 0
        %1170 = vmatprep.subr.bf16.mxu0 0
        %1171 = vmatpush1.bf16.msra.mxu0 0
        %1172 = vmatprep.subr.bf16.mxu0 0
        %1173 = vmatpush1.bf16.msra.mxu0 0
        %1174 = vmatprep.subr.bf16.mxu0 0
        %1175 = vmatpush1.bf16.msra.mxu0 0
        %1176 = vmatprep.subr.bf16.mxu0 0
        %1177 = vmatpush1.bf16.msra.mxu0 0
        %1178 = vmatprep.subr.bf16.mxu0 0
        %1179 = vmatpush1.bf16.msra.mxu0 0
        %1180 = vmatprep.subr.bf16.mxu0 0
        %1181 = vmatpush1.bf16.msra.mxu0 0
        %1182 = vmatprep.subr.bf16.mxu0 0
        %1183 = vmatpush1.bf16.msra.mxu0 0
        %1184 = vmatprep.subr.bf16.mxu0 0
        %1185 = vmatpush1.bf16.msra.mxu0 0
        %1186 = vmatprep.subr.bf16.mxu0 0
        %1187 = vmatpush1.bf16.msra.mxu0 0
        %1188 = vmatprep.mubr.bf16.mxu0 0
        %1189 = vmatmul.mubr.bf16.gmra.mrb[0].mxu0 %v1151
        %v1190 = vpop.f32.mrb[0].mxu0
        %v1191 = vadd.f32 0.0, %v1190
        %v1192 = vpop.f32.mrb[0].mxu0
        %v1193 = vpop.f32.mrb[0].mxu0
        %v1194 = vpop.f32.mrb[0].mxu0
        %1195 = vdwg.mxu0
        %v1196 = vpack.c.bf16 %v1191, %v1191
        %v1199 = vunpack.c.l.b16 %v931
        %v1200 = vunpack.c.l.b16 %v932
        %v1201 = vpack.c.b16 %v1200, %v1199
        %v1204 = vsel %vm427, %v1196, 0
        %1206 = vmatprep.subr.bf16.mxu0 0
        %1207 = vmatpush1.bf16.msra.mxu0 %v1201
        %1208 = vmatprep.subr.bf16.mxu0 0
        %1209 = vmatpush1.bf16.msra.mxu0 0
        %1210 = vmatprep.subr.bf16.mxu0 0
        %1211 = vmatpush1.bf16.msra.mxu0 0
        %1212 = vmatprep.subr.bf16.mxu0 0
        %1213 = vmatpush1.bf16.msra.mxu0 0
        %1214 = vmatprep.subr.bf16.mxu0 0
        %1215 = vmatpush1.bf16.msra.mxu0 0
        %1216 = vmatprep.subr.bf16.mxu0 0
        %1217 = vmatpush1.bf16.msra.mxu0 0
        %1218 = vmatprep.subr.bf16.mxu0 0
        %1219 = vmatpush1.bf16.msra.mxu0 0
        %1220 = vmatprep.subr.bf16.mxu0 0
        %1221 = vmatpush1.bf16.msra.mxu0 0
        %1222 = vmatprep.subr.bf16.mxu0 0
        %1223 = vmatpush1.bf16.msra.mxu0 0
        %1224 = vmatprep.subr.bf16.mxu0 0
        %1225 = vmatpush1.bf16.msra.mxu0 0
        %1226 = vmatprep.subr.bf16.mxu0 0
        %1227 = vmatpush1.bf16.msra.mxu0 0
        %1228 = vmatprep.subr.bf16.mxu0 0
        %1229 = vmatpush1.bf16.msra.mxu0 0
        %1230 = vmatprep.subr.bf16.mxu0 0
        %1231 = vmatpush1.bf16.msra.mxu0 0
        %1232 = vmatprep.subr.bf16.mxu0 0
        %1233 = vmatpush1.bf16.msra.mxu0 0
        %1234 = vmatprep.subr.bf16.mxu0 0
        %1235 = vmatpush1.bf16.msra.mxu0 0
        %1236 = vmatprep.subr.bf16.mxu0 0
        %1237 = vmatpush1.bf16.msra.mxu0 0
        %1238 = vmatprep.mubr.bf16.mxu0 0
        %1239 = vmatmul.mubr.bf16.gmra.mrb[0].mxu0 %v1204
        %v1240 = vpop.f32.mrb[0].mxu0
        %v1241 = vadd.f32 0.0, %v1240
        %v1242 = vpop.f32.mrb[0].mxu0
        %v1243 = vpop.f32.mrb[0].mxu0
        %v1244 = vpop.f32.mrb[0].mxu0
        %1245 = vdwg.mxu0
        %v1246 = vadd.f32 %v910, %v1241
        %s1247 = scalar_lea.vmem %s1, 48
        %v1248 = vld [vmem:[%s1247] sm:$0xf]
        %v1249 = vld [vmem:[%s1247 + $0x4] sm:$0xf]
        %v1250 = vld [vmem:[%s1247 + $0x8] sm:$0xf]
        %v1251 = vld [vmem:[%s1247 + $0xc] sm:$0xf]
        %s1252 = scalar_lea.vmem %s2, 48
        %v1253 = vld [vmem:[%s1252] sm:$0xf]
        %v1254 = vld [vmem:[%s1252 + $0x4] sm:$0xf]
        %v1255 = vld [vmem:[%s1252 + $0x8] sm:$0xf]
        %v1256 = vld [vmem:[%s1252 + $0xc] sm:$0xf]
        %s1257 = scalar_lea.vmem %s3, 48
        %v1258 = vld [vmem:[%s1257] sm:$0xf]
        %v1259 = vld [vmem:[%s1257 + $0x4] sm:$0xf]
        %v1260 = vld [vmem:[%s1257 + $0x8] sm:$0xf]
        %v1261 = vld [vmem:[%s1257 + $0xc] sm:$0xf]
        %s1262 = scalar_lea.vmem %s4, 24
        %v1263 = vld [vmem:[%s1262] sm:$0xf]
        %v1264 = vld [vmem:[%s1262 + $0x4] sm:$0xf]
        %v1269 = vunpack.c.l.b16 %v1248
        %v1270 = vunpack.c.l.b16 %v1249
        %v1271 = vunpack.c.l.b16 %v1250
        %v1272 = vunpack.c.l.b16 %v1251
        %v1273 = vpack.c.b16 %v1270, %v1269
        %v1274 = vpack.c.b16 %v1272, %v1271
        %1277 = vmatprep.subr.bf16.mxu0 0
        %1278 = vmatpush1.bf16.msra.mxu0 %v1273
        %1279 = vmatprep.subr.bf16.mxu0 0
        %1280 = vmatpush1.bf16.msra.mxu0 %v1274
        %1281 = vmatprep.subr.bf16.mxu0 0
        %1282 = vmatpush1.bf16.msra.mxu0 0
        %1283 = vmatprep.subr.bf16.mxu0 0
        %1284 = vmatpush1.bf16.msra.mxu0 0
        %1285 = vmatprep.subr.bf16.mxu0 0
        %1286 = vmatpush1.bf16.msra.mxu0 0
        %1287 = vmatprep.subr.bf16.mxu0 0
        %1288 = vmatpush1.bf16.msra.mxu0 0
        %1289 = vmatprep.subr.bf16.mxu0 0
        %1290 = vmatpush1.bf16.msra.mxu0 0
        %1291 = vmatprep.subr.bf16.mxu0 0
        %1292 = vmatpush1.bf16.msra.mxu0 0
        %1293 = vmatprep.subr.bf16.mxu0 0
        %1294 = vmatpush1.bf16.msra.mxu0 0
        %1295 = vmatprep.subr.bf16.mxu0 0
        %1296 = vmatpush1.bf16.msra.mxu0 0
        %1297 = vmatprep.subr.bf16.mxu0 0
        %1298 = vmatpush1.bf16.msra.mxu0 0
        %1299 = vmatprep.subr.bf16.mxu0 0
        %1300 = vmatpush1.bf16.msra.mxu0 0
        %1301 = vmatprep.subr.bf16.mxu0 0
        %1302 = vmatpush1.bf16.msra.mxu0 0
        %1303 = vmatprep.subr.bf16.mxu0 0
        %1304 = vmatpush1.bf16.msra.mxu0 0
        %1305 = vmatprep.subr.bf16.mxu0 0
        %1306 = vmatpush1.bf16.msra.mxu0 0
        %1307 = vmatprep.subr.bf16.mxu0 0
        %1308 = vmatpush1.bf16.msra.mxu0 0
        %1309 = vmatprep.mubr.bf16.mxu0 0
        %1310 = vmatmul.mubr.bf16.gmra.mrb[0].mxu0 %v278
        %v1311 = vpop.f32.mrb[0].mxu0
        %v1312 = vadd.f32 0.0, %v1311
        %v1313 = vpop.f32.mrb[0].mxu0
        %v1314 = vpop.f32.mrb[0].mxu0
        %v1315 = vpop.f32.mrb[0].mxu0
        %1316 = vdwg.mxu0
        %v1321 = vunpack.c.l.b16 %v1253
        %v1322 = vunpack.c.l.b16 %v1254
        %v1323 = vunpack.c.l.b16 %v1255
        %v1324 = vunpack.c.l.b16 %v1256
        %v1325 = vpack.c.b16 %v1322, %v1321
        %v1326 = vpack.c.b16 %v1324, %v1323
        %1329 = vmatprep.subr.bf16.mxu0 0
        %1330 = vmatpush1.bf16.msra.mxu0 %v1325
        %1331 = vmatprep.subr.bf16.mxu0 0
        %1332 = vmatpush1.bf16.msra.mxu0 %v1326
        %1333 = vmatprep.subr.bf16.mxu0 0
        %1334 = vmatpush1.bf16.msra.mxu0 0
        %1335 = vmatprep.subr.bf16.mxu0 0
        %1336 = vmatpush1.bf16.msra.mxu0 0
        %1337 = vmatprep.subr.bf16.mxu0 0
        %1338 = vmatpush1.bf16.msra.mxu0 0
        %1339 = vmatprep.subr.bf16.mxu0 0
        %1340 = vmatpush1.bf16.msra.mxu0 0
        %1341 = vmatprep.subr.bf16.mxu0 0
        %1342 = vmatpush1.bf16.msra.mxu0 0
        %1343 = vmatprep.subr.bf16.mxu0 0
        %1344 = vmatpush1.bf16.msra.mxu0 0
        %1345 = vmatprep.subr.bf16.mxu0 0
        %1346 = vmatpush1.bf16.msra.mxu0 0
        %1347 = vmatprep.subr.bf16.mxu0 0
        %1348 = vmatpush1.bf16.msra.mxu0 0
        %1349 = vmatprep.subr.bf16.mxu0 0
        %1350 = vmatpush1.bf16.msra.mxu0 0
        %1351 = vmatprep.subr.bf16.mxu0 0
        %1352 = vmatpush1.bf16.msra.mxu0 0
        %1353 = vmatprep.subr.bf16.mxu0 0
        %1354 = vmatpush1.bf16.msra.mxu0 0
        %1355 = vmatprep.subr.bf16.mxu0 0
        %1356 = vmatpush1.bf16.msra.mxu0 0
        %1357 = vmatprep.subr.bf16.mxu0 0
        %1358 = vmatpush1.bf16.msra.mxu0 0
        %1359 = vmatprep.subr.bf16.mxu0 0
        %1360 = vmatpush1.bf16.msra.mxu0 0
        %1361 = vmatprep.mubr.bf16.mxu0 0
        %1362 = vmatmul.mubr.bf16.gmra.mrb[0].mxu0 %v278
        %v1363 = vpop.f32.mrb[0].mxu0
        %v1364 = vadd.f32 0.0, %v1363
        %v1365 = vpop.f32.mrb[0].mxu0
        %v1366 = vpop.f32.mrb[0].mxu0
        %v1367 = vpop.f32.mrb[0].mxu0
        %1368 = vdwg.mxu0
        %v1373 = vunpack.c.l.b16 %v1258
        %v1374 = vunpack.c.l.b16 %v1259
        %v1375 = vunpack.c.l.b16 %v1260
        %v1376 = vunpack.c.l.b16 %v1261
        %v1377 = vpack.c.b16 %v1374, %v1373
        %v1378 = vpack.c.b16 %v1376, %v1375
        %1381 = vmatprep.subr.bf16.mxu0 0
        %1382 = vmatpush1.bf16.msra.mxu0 %v1377
        %1383 = vmatprep.subr.bf16.mxu0 0
        %1384 = vmatpush1.bf16.msra.mxu0 %v1378
        %1385 = vmatprep.subr.bf16.mxu0 0
        %1386 = vmatpush1.bf16.msra.mxu0 0
        %1387 = vmatprep.subr.bf16.mxu0 0
        %1388 = vmatpush1.bf16.msra.mxu0 0
        %1389 = vmatprep.subr.bf16.mxu0 0
        %1390 = vmatpush1.bf16.msra.mxu0 0
        %1391 = vmatprep.subr.bf16.mxu0 0
        %1392 = vmatpush1.bf16.msra.mxu0 0
        %1393 = vmatprep.subr.bf16.mxu0 0
        %1394 = vmatpush1.bf16.msra.mxu0 0
        %1395 = vmatprep.subr.bf16.mxu0 0
        %1396 = vmatpush1.bf16.msra.mxu0 0
        %1397 = vmatprep.subr.bf16.mxu0 0
        %1398 = vmatpush1.bf16.msra.mxu0 0
        %1399 = vmatprep.subr.bf16.mxu0 0
        %1400 = vmatpush1.bf16.msra.mxu0 0
        %1401 = vmatprep.subr.bf16.mxu0 0
        %1402 = vmatpush1.bf16.msra.mxu0 0
        %1403 = vmatprep.subr.bf16.mxu0 0
        %1404 = vmatpush1.bf16.msra.mxu0 0
        %1405 = vmatprep.subr.bf16.mxu0 0
        %1406 = vmatpush1.bf16.msra.mxu0 0
        %1407 = vmatprep.subr.bf16.mxu0 0
        %1408 = vmatpush1.bf16.msra.mxu0 0
        %1409 = vmatprep.subr.bf16.mxu0 0
        %1410 = vmatpush1.bf16.msra.mxu0 0
        %1411 = vmatprep.subr.bf16.mxu0 0
        %1412 = vmatpush1.bf16.msra.mxu0 0
        %1413 = vmatprep.mubr.bf16.mxu0 0
        %1414 = vmatmul.mubr.bf16.gmra.mrb[0].mxu0 %v278
        %v1415 = vpop.f32.mrb[0].mxu0
        %v1416 = vadd.f32 0.0, %v1415
        %v1417 = vpop.f32.mrb[0].mxu0
        %v1418 = vpop.f32.mrb[0].mxu0
        %v1419 = vpop.f32.mrb[0].mxu0
        %1420 = vdwg.mxu0
        %v1421 = vpack.c.bf16 %v1312, %v1312
        %v1422 = vpack.c.bf16 %v1364, %v1364
        %v1423 = vpack.c.bf16 %v1416, %v1416
        %v1425 = vsel %vm427, %v1421, 0
        %v1428 = vsel %vm427, %v1422, 0
        %1430 = vmatprep.subr.bf16.mxu0 0
        %1431 = vmatpush1.bf16.xpose.msra.mxu0 %v1428
        %1432 = vmatprep.subr.bf16.mxu0 0
        %1433 = vmatpush1.bf16.xpose.msra.mxu0 0
        %1434 = vmatprep.subr.bf16.mxu0 0
        %1435 = vmatpush1.bf16.xpose.msra.mxu0 0
        %1436 = vmatprep.subr.bf16.mxu0 0
        %1437 = vmatpush1.bf16.xpose.msra.mxu0 0
        %1438 = vmatprep.subr.bf16.mxu0 0
        %1439 = vmatpush1.bf16.xpose.msra.mxu0 0
        %1440 = vmatprep.subr.bf16.mxu0 0
        %1441 = vmatpush1.bf16.xpose.msra.mxu0 0
        %1442 = vmatprep.subr.bf16.mxu0 0
        %1443 = vmatpush1.bf16.xpose.msra.mxu0 0
        %1444 = vmatprep.subr.bf16.mxu0 0
        %1445 = vmatpush1.bf16.xpose.msra.mxu0 0
        %1446 = vmatprep.subr.bf16.mxu0 0
        %1447 = vmatpush1.bf16.xpose.msra.mxu0 0
        %1448 = vmatprep.subr.bf16.mxu0 0
        %1449 = vmatpush1.bf16.xpose.msra.mxu0 0
        %1450 = vmatprep.subr.bf16.mxu0 0
        %1451 = vmatpush1.bf16.xpose.msra.mxu0 0
        %1452 = vmatprep.subr.bf16.mxu0 0
        %1453 = vmatpush1.bf16.xpose.msra.mxu0 0
        %1454 = vmatprep.subr.bf16.mxu0 0
        %1455 = vmatpush1.bf16.xpose.msra.mxu0 0
        %1456 = vmatprep.subr.bf16.mxu0 0
        %1457 = vmatpush1.bf16.xpose.msra.mxu0 0
        %1458 = vmatprep.subr.bf16.mxu0 0
        %1459 = vmatpush1.bf16.xpose.msra.mxu0 0
        %1460 = vmatprep.subr.bf16.mxu0 0
        %1461 = vmatpush1.bf16.xpose.msra.mxu0 0
        %1462 = vmatprep.mubr.bf16.mxu0 0
        %1463 = vmatmul.mubr.bf16.gmra.mrb[0].mxu0 %v1425
        %v1464 = vpop.f32.mrb[0].mxu0
        %v1465 = vadd.f32 0.0, %v1464
        %v1466 = vpop.f32.mrb[0].mxu0
        %v1467 = vpop.f32.mrb[0].mxu0
        %v1468 = vpop.f32.mrb[0].mxu0
        %1469 = vdwg.mxu0
        %v1470 = vsel %vm474, %v1465, -inf
        %1471 = vmax.xlane.f32.xlu0 %v1470
        %v1472 = vpop.xlane.xlu0 %1471
        %v1473 = vsub.f32 %v1465, %v1472
        %v1474 = vmul.f32 %v1473, 1.442695
        %v1475 = vpow.pop %v1474
        %v1476 = vsel %vm474, %v1475, 0.0
        %1477 = vadd.xlane.f32.xlu0 %v1476
        %v1478 = vpop.xlane.xlu0 %1477
        %v1479 = vrcp.pop %v1478
        %v1480 = vmul.f32 %v1475, %v1479
        %v1481 = vpack.c.bf16 %v1480, %v1480
        %v1483 = vsel %vm474, %v1481, 0
        %v1486 = vsel %vm490, %v1423, 0
        %1488 = vmatprep.subr.bf16.mxu0 0
        %1489 = vmatpush1.bf16.msra.mxu0 %v1486
        %1490 = vmatprep.subr.bf16.mxu0 0
        %1491 = vmatpush1.bf16.msra.mxu0 0
        %1492 = vmatprep.subr.bf16.mxu0 0
        %1493 = vmatpush1.bf16.msra.mxu0 0
        %1494 = vmatprep.subr.bf16.mxu0 0
        %1495 = vmatpush1.bf16.msra.mxu0 0
        %1496 = vmatprep.subr.bf16.mxu0 0
        %1497 = vmatpush1.bf16.msra.mxu0 0
        %1498 = vmatprep.subr.bf16.mxu0 0
        %1499 = vmatpush1.bf16.msra.mxu0 0
        %1500 = vmatprep.subr.bf16.mxu0 0
        %1501 = vmatpush1.bf16.msra.mxu0 0
        %1502 = vmatprep.subr.bf16.mxu0 0
        %1503 = vmatpush1.bf16.msra.mxu0 0
        %1504 = vmatprep.subr.bf16.mxu0 0
        %1505 = vmatpush1.bf16.msra.mxu0 0
        %1506 = vmatprep.subr.bf16.mxu0 0
        %1507 = vmatpush1.bf16.msra.mxu0 0
        %1508 = vmatprep.subr.bf16.mxu0 0
        %1509 = vmatpush1.bf16.msra.mxu0 0
        %1510 = vmatprep.subr.bf16.mxu0 0
        %1511 = vmatpush1.bf16.msra.mxu0 0
        %1512 = vmatprep.subr.bf16.mxu0 0
        %1513 = vmatpush1.bf16.msra.mxu0 0
        %1514 = vmatprep.subr.bf16.mxu0 0
        %1515 = vmatpush1.bf16.msra.mxu0 0
        %1516 = vmatprep.subr.bf16.mxu0 0
        %1517 = vmatpush1.bf16.msra.mxu0 0
        %1518 = vmatprep.subr.bf16.mxu0 0
        %1519 = vmatpush1.bf16.msra.mxu0 0
        %1520 = vmatprep.mubr.bf16.mxu0 0
        %1521 = vmatmul.mubr.bf16.gmra.mrb[0].mxu0 %v1483
        %v1522 = vpop.f32.mrb[0].mxu0
        %v1523 = vadd.f32 0.0, %v1522
        %v1524 = vpop.f32.mrb[0].mxu0
        %v1525 = vpop.f32.mrb[0].mxu0
        %v1526 = vpop.f32.mrb[0].mxu0
        %1527 = vdwg.mxu0
        %v1528 = vpack.c.bf16 %v1523, %v1523
        %v1531 = vunpack.c.l.b16 %v1263
        %v1532 = vunpack.c.l.b16 %v1264
        %v1533 = vpack.c.b16 %v1532, %v1531
        %v1536 = vsel %vm427, %v1528, 0
        %1538 = vmatprep.subr.bf16.mxu0 0
        %1539 = vmatpush1.bf16.msra.mxu0 %v1533
        %1540 = vmatprep.subr.bf16.mxu0 0
        %1541 = vmatpush1.bf16.msra.mxu0 0
        %1542 = vmatprep.subr.bf16.mxu0 0
        %1543 = vmatpush1.bf16.msra.mxu0 0
        %1544 = vmatprep.subr.bf16.mxu0 0
        %1545 = vmatpush1.bf16.msra.mxu0 0
        %1546 = vmatprep.subr.bf16.mxu0 0
        %1547 = vmatpush1.bf16.msra.mxu0 0
        %1548 = vmatprep.subr.bf16.mxu0 0
        %1549 = vmatpush1.bf16.msra.mxu0 0
        %1550 = vmatprep.subr.bf16.mxu0 0
        %1551 = vmatpush1.bf16.msra.mxu0 0
        %1552 = vmatprep.subr.bf16.mxu0 0
        %1553 = vmatpush1.bf16.msra.mxu0 0
        %1554 = vmatprep.subr.bf16.mxu0 0
        %1555 = vmatpush1.bf16.msra.mxu0 0
        %1556 = vmatprep.subr.bf16.mxu0 0
        %1557 = vmatpush1.bf16.msra.mxu0 0
        %1558 = vmatprep.subr.bf16.mxu0 0
        %1559 = vmatpush1.bf16.msra.mxu0 0
        %1560 = vmatprep.subr.bf16.mxu0 0
        %1561 = vmatpush1.bf16.msra.mxu0 0
        %1562 = vmatprep.subr.bf16.mxu0 0
        %1563 = vmatpush1.bf16.msra.mxu0 0
        %1564 = vmatprep.subr.bf16.mxu0 0
        %1565 = vmatpush1.bf16.msra.mxu0 0
        %1566 = vmatprep.subr.bf16.mxu0 0
        %1567 = vmatpush1.bf16.msra.mxu0 0
        %1568 = vmatprep.subr.bf16.mxu0 0
        %1569 = vmatpush1.bf16.msra.mxu0 0
        %1570 = vmatprep.mubr.bf16.mxu0 0
        %1571 = vmatmul.mubr.bf16.gmra.mrb[0].mxu0 %v1536
        %v1572 = vpop.f32.mrb[0].mxu0
        %v1573 = vadd.f32 0.0, %v1572
        %v1574 = vpop.f32.mrb[0].mxu0
        %v1575 = vpop.f32.mrb[0].mxu0
        %v1576 = vpop.f32.mrb[0].mxu0
        %1577 = vdwg.mxu0
        %v1578 = vadd.f32 %v1246, %v1573
        %v1579 = vld [vmem:[%s5] sm:$0x1]
        %v1581 = vlaneseq
        %v1582 = vshrl.u32 %v1581, 7
        %v1583 = vsub.s32 0, %v1582
        %v1584 = vrot.slane %v1579, %v1583
        %v1586 = vadd.f32 %v1578, %v1584
        %1587 = vst.msk [vmem:[%s242] sm:$0xff] %vm276, %v1586
        %s1588 = sand.u32 %s159, 1
        %s1589 = scalar_lea.sflag [#allocation3], %s1588
        %s1590 = sand.u32 %s159, 1
        %s1591 = smul.addr %s1590, 8
        %s1592 = scalar_lea.vmem [#allocation2], %s1591
        // Predicated region
        $region45: #{tpu_custom_call.1} parent=43 // pred_check
          %p1593 = pneg %p169
        $region46: #{tpu_custom_call.1} parent=43 // pred_check_branch
          %1595 = sbr.rel (%p1593) target = $region48
        $region47: #{tpu_custom_call.1} parent=43 // pred_region
          %s1597 = ssub.s32 128, 128
          %1598 = vsyncadd %s1589, %s1597
          %s1599 = smul.addr %s20, 128
          %s1600 = scalar_lea.hbm %s6, %s1599
          %s1602 = sshll.u32 %s1592, 4
          %s1603 = int_to_ptr.vmem [resolvable:$true] %s1602
          %1605 = dma.vmem_to_hbm [thread:$0]  %s1603, 128, %s1600, %s1589
        $region48: #{tpu_custom_call.1} parent=43 // pred_fallthru
          _
      $region44: #{tpu_custom_call.1} parent=5 // pred_fallthru
        _
      %p1606 = scmp.le.s32.totalorder 2, %s15
      // Predicated region
      $region49: #{tpu_custom_call.1} parent=5 // pred_check
        %p1607 = pneg %p1606
      $region50: #{tpu_custom_call.1} parent=5 // pred_check_branch
        %1609 = sbr.rel (%p1607) target = $region52
      $region51: #{tpu_custom_call.1} parent=5 // pred_region
        %s1610 = ssub.s32 %s15, 2
        // Predicated region
        $region53: #{tpu_custom_call.1} parent=51 // pred_check
          %p1611 = pneg %p175
        $region54: #{tpu_custom_call.1} parent=51 // pred_check_branch
          %1613 = sbr.rel (%p1611) target = $region56
        $region55: #{tpu_custom_call.1} parent=51 // pred_region
          %s1614 = sand.u32 %s160, 1
          %s1615 = scalar_lea.sflag [#allocation3], %s1614
          %s1616 = sand.u32 %s160, 1
          %s1617 = smul.addr %s1616, 8
          %s1618 = scalar_lea.vmem [#allocation2], %s1617
          %1619 = dma.done %s1615, 128
        $region56: #{tpu_custom_call.1} parent=51 // pred_fallthru
          _
      $region52: #{tpu_custom_call.1} parent=5 // pred_fallthru
        _
    $region6: #{tpu_custom_call.1} parent=1 // loop_footer
      %s19 = sadd.s32 1, %s15
    $region7: #{tpu_custom_call.1} parent=1 // loop_footer_branch
      %14 = sbr.rel target = $region3
    $region8: #{tpu_custom_call.1} parent=1 // loop_exit
      _
    %1620 = vsyncpa [#allocation3], 1
    %s1621 = scalar_lea.sflag [#allocation3], 1
    %1622 = vsyncpa %s1621, 1

</llo_original>
